<compile_context>
chip_gen: v5e
topology: v5e:2x2
jax: 0.10.0
libtpu: 0.0.40
codegen_flags: <defaults>
</compile_context>

<pallas_src>
import math
import jax
import jax.numpy as jnp
from jax import lax
from jax.experimental import pallas as pl
from jax.experimental.pallas import tpu as pltpu


# ----------------------------- in-kernel helpers -----------------------------

def _gelu(x):
    # gelu tanh kept in f32 (EUP path)
    return 0.5 * x * (1.0 + jnp.tanh(math.sqrt(2.0 / math.pi) * (x + 0.044715 * x ** 3)))


def _layer_norm(v, w, b, eps):
    u = jnp.mean(v, axis=-1, keepdims=True)
    s = jnp.mean((v - u) ** 2, axis=-1, keepdims=True)
    return w * ((v - u) * lax.rsqrt(s + eps)) + b


# --------------------------------- kernel ------------------------------------

def make_dual_elem_kernel(n_head, scale, eps, S, E, emit_w,
                          compute_dtype=jnp.bfloat16):
    HD = E // n_head
    inv_sqrt_hd = 1.0 / math.sqrt(HD)
    NEG = -1e10
    cdt = compute_dtype

    def kernel(xy_ref,
               ln1_w_ref, ln1_b_ref,
               w_attn_ref, b_attn_ref, w_cproj_ref, b_cproj_ref,
               ln2_w_ref, ln2_b_ref,
               w_fc_ref, b_fc_ref, w_mproj_ref, b_mproj_ref,
               *out_refs):
        if emit_w:
            y_out_ref, w_out_ref = out_refs
        else:
            (y_out_ref,) = out_refs

        xy = xy_ref[0].astype(jnp.float32)                  # (2, S, E) f32

        # fused LayerNorm of both streams (stream 0 -> ln_1_x, stream 1 -> ln_1_y)
        u = jnp.mean(xy, axis=-1, keepdims=True)
        var = jnp.mean((xy - u) ** 2, axis=-1, keepdims=True)
        xyn = ln1_w_ref[...] * ((xy - u) * lax.rsqrt(var + eps)) + ln1_b_ref[...]
        yn = xyn[1]                                          # residual stream (= ln_1_y(y))

        # single c_attn matmul over both stacked streams: (2S, E) @ (E, 3E)
        c = jnp.dot(xyn.reshape(2 * S, E).astype(cdt), w_attn_ref[...],
                    preferred_element_type=jnp.float32) + b_attn_ref[0]
        cx = c[:S]                                           # (S, 3E) f32
        cy = c[S:]

        def split_heads(t):                                  # (S, E) -> (H, S, HD)
            return jnp.transpose(t.reshape(S, n_head, HD), (1, 0, 2))

        kx_h = split_heads(cx[:, E:2 * E])
        vx_h = split_heads(cx[:, 2 * E:3 * E])
        qy_h = split_heads(cy[:, 0:E])
        ky_h = split_heads(cy[:, E:2 * E])
        vy_h = split_heads(cy[:, 2 * E:3 * E])
        if scale:
            qy_h = qy_h * inv_sqrt_hd                        # fold 1/sqrt(HD) into q once

        rows = lax.broadcasted_iota(jnp.int32, (S, S), 0)
        cols = lax.broadcasted_iota(jnp.int32, (S, S), 1)
        causal = rows >= cols                                # tril ("bias" buffer)

        # y->x scores, head-batched on the MXU (bf16 operands, f32 accumulation)
        s_x = jnp.einsum("hqd,hkd->hqk", qy_h.astype(cdt), kx_h.astype(cdt),
                         preferred_element_type=jnp.float32)          # (H, S, S)
        s_x = jnp.where(causal[None], s_x, NEG)
        # identity-mask ("spot") trick: only the diagonal of qy @ ky^T survives;
        # computed for all heads at once (f32 VPU mul + one reduce).
        d_y = jnp.sum(qy_h * ky_h, axis=-1, keepdims=True)            # (H, S, 1)

        # softmax over the virtual (S, 2S) logits row, all in f32
        m = jnp.maximum(jnp.max(s_x, axis=-1, keepdims=True), d_y)
        e_x = jnp.exp(s_x - m)                               # masked entries -> exactly 0
        e_d = jnp.exp(d_y - m)
        # NOTE: approx reciprocal => rows of w sum to 1 only to ~2^-12 rel. error.
        inv = pl.reciprocal(jnp.sum(e_x, axis=-1, keepdims=True) + e_d, approx=True)
        p_x = e_x * inv                                      # (H, S, S)
        p_d = e_d * inv                                      # (H, S, 1)

        # attention output: probs_x @ vx + p_diag * vy, then merge_heads
        a_h = jnp.einsum("hqk,hkd->hqd", p_x.astype(cdt), vx_h.astype(cdt),
                         preferred_element_type=jnp.float32) + p_d * vy_h
        a = jnp.transpose(a_h, (1, 0, 2)).reshape(S, E)      # (S, E)

        if emit_w:
            eye = rows == cols
            w_slab = jnp.concatenate([p_x, jnp.where(eye[None], p_d, 0.0)], axis=-1)
            w_out_ref[0] = w_slab.astype(w_out_ref.dtype)    # one store for all heads

        # c_proj + residual on the layernormed y (torch reassigns y = ln_1_y(y))
        dy = jnp.dot(a.astype(cdt), w_cproj_ref[...],
                     preferred_element_type=jnp.float32) + b_cproj_ref[0]
        # TODO(synk): attn_pdrop / resid_pdrop dropout omitted (eval mode => identity).
        y1 = yn + dy

        # MLP(ln_2_y(y))
        y2n = _layer_norm(y1, ln2_w_ref[0], ln2_b_ref[0], eps)
        hmid = _gelu(jnp.dot(y2n.astype(cdt), w_fc_ref[...],
                             preferred_element_type=jnp.float32) + b_fc_ref[0])
        h2 = jnp.dot(hmid.astype(cdt), w_mproj_ref[...],
                     preferred_element_type=jnp.float32) + b_mproj_ref[0]

        y_out_ref[0] = (y1 + h2).astype(y_out_ref.dtype)

    return kernel


# --------------------------------- wrapper -----------------------------------

PARAM_ORDER = ["ln1_w", "ln1_b",
               "w_attn", "b_attn", "w_cproj", "b_cproj",
               "ln2_w", "ln2_b",
               "w_fc", "b_fc", "w_mproj", "b_mproj"]
WEIGHT_KEYS = ("w_attn", "w_cproj", "w_fc", "w_mproj")


def _vmem_limit_bytes(S, E, H, w_bytes):
    bf16, f32 = 2, 4
    # invariant weights (bf16), single-buffered via pl.Buffered(1)
    weights = (E * 3 * E + E * E + E * 4 * E + 4 * E * E) * bf16
    # small f32 params (LN weights/biases + matmul biases), single-buffered
    small = (4 * E + 3 * E + E + 2 * E + 4 * E + E) * f32
    # per-step I/O blocks (xy in bf16, y out f32, w out), x2 for double-buffering
    io = 2 * ((2 * S * E) * bf16 + (S * E) * f32 + (H * S * 2 * S) * w_bytes)
    # in-kernel temporaries (c, split heads, scores/probs, w slab, hmid, misc)
    tmp = (2 * S * 3 * E + 6 * S * E + 3 * H * S * S + H * S * 2 * S
           + S * 4 * E + 8 * S * E) * f32
    need = int(1.3 * (weights + small + io + tmp))
    try:
        cap = pltpu.get_tpu_info().vmem_capacity_bytes
    except Exception:
        cap = 64 << 20     # conservative per-TC fallback (v7x)
    # leave ~20% headroom below physical capacity for compiler scratch
    return min(max(need, 32 << 20), int(0.8 * cap))


def dual_elem_forward(x, y, params, *, n_head, scale=False, eps=1e-12,
                      compute_dtype=jnp.bfloat16, w_dtype=jnp.bfloat16,
                      return_weights=True):
    B, S, E = x.shape
    kernel = make_dual_elem_kernel(n_head, scale, eps, S, E, return_weights,
                                   compute_dtype)

    # stack the two streams so ONE DMA per step delivers the c_attn operand,
    # in bf16 (halves activation HBM->VMEM traffic; LN stats recomputed in f32)
    xy = jnp.stack([x, y], axis=1).astype(compute_dtype)          # (B, 2, S, E)

    prepared = {
        "ln1_w": jnp.stack([params["ln1x_w"], params["ln1y_w"]], axis=0),  # (2,1,E)
        "ln1_b": jnp.stack([params["ln1x_b"], params["ln1y_b"]], axis=0),
        "w_attn": params["w_attn"], "b_attn": params["b_attn"],
        "w_cproj": params["w_cproj"], "b_cproj": params["b_cproj"],
        "ln2_w": params["ln2_w"], "ln2_b": params["ln2_b"],
        "w_fc": params["w_fc"], "b_fc": params["b_fc"],
        "w_mproj": params["w_mproj"], "b_mproj": params["b_mproj"],
    }
    # large matmul weights in bf16 (halves DMA + VMEM, native MXU path)
    for k in WEIGHT_KEYS:
        prepared[k] = prepared[k].astype(compute_dtype)

    def _const_spec(p):
        nd = p.ndim
        # grid-invariant => single-buffer (no pointless 2x VMEM)
        return pl.BlockSpec(p.shape, lambda b, _nd=nd: (0,) * _nd,
                            pipeline_mode=pl.Buffered(1))

    in_specs = [pl.BlockSpec((1, 2, S, E), lambda b: (b, 0, 0, 0))] + \
               [_const_spec(prepared[k]) for k in PARAM_ORDER]

    y_struct = jax.ShapeDtypeStruct((B, S, E), jnp.float32)
    y_spec = pl.BlockSpec((1, S, E), lambda b: (b, 0, 0))
    if return_weights:
        out_shape = (y_struct,
                     jax.ShapeDtypeStruct((B, n_head, S, 2 * S), w_dtype))
        out_specs = (y_spec,
                     pl.BlockSpec((1, n_head, S, 2 * S), lambda b: (b, 0, 0, 0)))
        w_bytes = jnp.dtype(w_dtype).itemsize
    else:
        out_shape, out_specs, w_bytes = y_struct, y_spec, 0

    return pl.pallas_call(
        kernel,
        out_shape=out_shape,
        grid=(B,),
        in_specs=in_specs,
        out_specs=out_specs,
        compiler_params=pltpu.CompilerParams(
            dimension_semantics=("parallel",),
            vmem_limit_bytes=_vmem_limit_bytes(S, E, n_head, w_bytes)),
    )(xy, *[prepared[k] for k in PARAM_ORDER])


# ------------------------- deterministic param init --------------------------

def init_params(key, E):
    ks = jax.random.split(key, 4)
    f32 = jnp.float32
    return {
        "ln1x_w": jnp.ones((1, E), f32), "ln1x_b": jnp.zeros((1, E), f32),
        "ln1y_w": jnp.ones((1, E), f32), "ln1y_b": jnp.zeros((1, E), f32),
        "w_attn": 0.02 * jax.random.normal(ks[0], (E, 3 * E), f32),
        "b_attn": jnp.zeros((1, 3 * E), f32),
        "w_cproj": 0.02 * jax.random.normal(ks[1], (E, E), f32),
        "b_cproj": jnp.zeros((1, E), f32),
        "ln2_w": jnp.ones((1, E), f32), "ln2_b": jnp.zeros((1, E), f32),
        "w_fc": 0.02 * jax.random.normal(ks[2], (E, 4 * E), f32),
        "b_fc": jnp.zeros((1, 4 * E), f32),
        "w_mproj": 0.02 * jax.random.normal(ks[3], (4 * E, E), f32),
        "b_mproj": jnp.zeros((1, E), f32),
    }


# ------------------------------ pure-JAX reference ---------------------------

def dual_elem_ref(x, y, params, *, n_head, scale=False, eps=1e-12):
    B, S, E = x.shape
    HD = E // n_head

    def ln(v, w, b):
        u = jnp.mean(v, -1, keepdims=True)
        s = jnp.mean((v - u) ** 2, -1, keepdims=True)
        return w[0] * ((v - u) / jnp.sqrt(s + eps)) + b[0]

    xn = ln(x, params["ln1x_w"], params["ln1x_b"])
    yn = ln(y, params["ln1y_w"], params["ln1y_b"])
    cx = xn @ params["w_attn"] + params["b_attn"][0]
    cy = yn @ params["w_attn"] + params["b_attn"][0]

    def split(c):
        q, k, v = jnp.split(c, 3, axis=-1)
        def heads(t):
            return t.reshape(B, S, n_head, HD).transpose(0, 2, 1, 3)
        return heads(q), heads(k), heads(v)

    _, kx, vx = split(cx)
    qy, ky, vy = split(cy)

    y2x = jnp.einsum("bhqd,bhkd->bhqk", qy, kx)
    y2y = jnp.einsum("bhqd,bhkd->bhqk", qy, ky)
    if scale:
        y2x /= math.sqrt(HD)
        y2y /= math.sqrt(HD)
    tril = jnp.tril(jnp.ones((S, S), jnp.float32))
    eye = jnp.eye(S, dtype=jnp.float32)
    y2x = y2x * tril - 1e10 * (1 - tril)
    y2y = y2y * eye - 1e10 * (1 - eye)
    w = jax.nn.softmax(jnp.concatenate([y2x, y2y], axis=-1), axis=-1)
    v = jnp.concatenate([vx, vy], axis=-2)
    a = jnp.einsum("bhqk,bhkd->bhqd", w, v)
    a = a.transpose(0, 2, 1, 3).reshape(B, S, E)
    dy = a @ params["w_cproj"] + params["b_cproj"][0]
    y1 = yn + dy
    y2n = ln(y1, params["ln2_w"], params["ln2_b"])
    h = y2n @ params["w_fc"] + params["b_fc"][0]
    h = 0.5 * h * (1 + jnp.tanh(math.sqrt(2 / math.pi) * (h + 0.044715 * h ** 3)))
    h2 = h @ params["w_mproj"] + params["b_mproj"][0]
    return y1 + h2, w


# ----------------------------------- main -------------------------------------

if __name__ == "__main__":
    B, S, E, H = 2, 8, 32, 4   # batch, n_ctx/seq, n_embd, n_head

    key = jax.random.PRNGKey(0)
    kx, ky, kp = jax.random.split(key, 3)
    x = jax.random.normal(kx, (B, S, E), jnp.float32)
    y = jax.random.normal(ky, (B, S, E), jnp.float32)
    params = init_params(kp, E)

    y_out, w_out = dual_elem_forward(x, y, params, n_head=H, scale=False)
    jax.block_until_ready((y_out, w_out))

    # variant without the attention-weights output (skips the w writeback)
    y_only = dual_elem_forward(x, y, params, n_head=H, scale=False,
                               return_weights=False)
    jax.block_until_ready(y_only)

    # f32 reference; kernel uses bf16 inputs/operands, so tolerances are relaxed.
    y_ref, w_ref = dual_elem_ref(x, y, params, n_head=H, scale=False)
    assert jnp.allclose(y_out, y_ref, atol=5e-2, rtol=5e-2), "y mismatch"
    assert jnp.allclose(y_only, y_ref, atol=5e-2, rtol=5e-2), "y (no-w) mismatch"
    assert jnp.allclose(w_out.astype(jnp.float32), w_ref, atol=3e-2, rtol=3e-2), "w mismatch"

    print("KERNEL_OK")
</pallas_src>

<mosaic_0001>
module attributes {stable_mosaic.version = 11 : i64} {
  func.func @kernel(%arg0: i32, %arg1: memref<1x2x8x32xbf16, #tpu.memory_space<vmem>>, %arg2: memref<2x1x32xf32, #tpu.memory_space<vmem>>, %arg3: memref<2x1x32xf32, #tpu.memory_space<vmem>>, %arg4: memref<32x96xbf16, #tpu.memory_space<vmem>>, %arg5: memref<1x96xf32, #tpu.memory_space<vmem>>, %arg6: memref<32x32xbf16, #tpu.memory_space<vmem>>, %arg7: memref<1x32xf32, #tpu.memory_space<vmem>>, %arg8: memref<1x32xf32, #tpu.memory_space<vmem>>, %arg9: memref<1x32xf32, #tpu.memory_space<vmem>>, %arg10: memref<32x128xbf16, #tpu.memory_space<vmem>>, %arg11: memref<1x128xf32, #tpu.memory_space<vmem>>, %arg12: memref<128x32xbf16, #tpu.memory_space<vmem>>, %arg13: memref<1x32xf32, #tpu.memory_space<vmem>>, %arg14: memref<1x8x32xf32, #tpu.memory_space<vmem>>, %arg15: memref<1x4x8x16xbf16, #tpu.memory_space<vmem>>) attributes {dimension_semantics = [#tpu.dimension_semantics<parallel>], iteration_bounds = array<i64: 2>, scalar_prefetch = 0 : i64, scratch_operands = 0 : i64, tpu.core_type = #tpu.core_type<tc>, window_params = [{transform_indices = @transform_0, window_bounds = array<i64: 1, 2, 8, 32>}, {pipeline_mode = #tpu.pipeline_mode<synchronous>, transform_indices = @transform_1, window_bounds = array<i64: 2, 1, 32>}, {pipeline_mode = #tpu.pipeline_mode<synchronous>, transform_indices = @transform_2, window_bounds = array<i64: 2, 1, 32>}, {pipeline_mode = #tpu.pipeline_mode<synchronous>, transform_indices = @transform_3, window_bounds = array<i64: 32, 96>}, {pipeline_mode = #tpu.pipeline_mode<synchronous>, transform_indices = @transform_4, window_bounds = array<i64: 1, 96>}, {pipeline_mode = #tpu.pipeline_mode<synchronous>, transform_indices = @transform_5, window_bounds = array<i64: 32, 32>}, {pipeline_mode = #tpu.pipeline_mode<synchronous>, transform_indices = @transform_6, window_bounds = array<i64: 1, 32>}, {pipeline_mode = #tpu.pipeline_mode<synchronous>, transform_indices = @transform_7, window_bounds = array<i64: 1, 32>}, {pipeline_mode = #tpu.pipeline_mode<synchronous>, transform_indices = @transform_8, window_bounds = array<i64: 1, 32>}, {pipeline_mode = #tpu.pipeline_mode<synchronous>, transform_indices = @transform_9, window_bounds = array<i64: 32, 128>}, {pipeline_mode = #tpu.pipeline_mode<synchronous>, transform_indices = @transform_10, window_bounds = array<i64: 1, 128>}, {pipeline_mode = #tpu.pipeline_mode<synchronous>, transform_indices = @transform_11, window_bounds = array<i64: 128, 32>}, {pipeline_mode = #tpu.pipeline_mode<synchronous>, transform_indices = @transform_12, window_bounds = array<i64: 1, 32>}, {transform_indices = @transform_13, window_bounds = array<i64: 1, 8, 32>}, {transform_indices = @transform_14, window_bounds = array<i64: 1, 4, 8, 16>}]} {
    %c0 = arith.constant 0 : index
    %c0_0 = arith.constant 0 : index
    %c0_1 = arith.constant 0 : index
    %c0_2 = arith.constant 0 : index
    %0 = vector.load %arg1[%c0, %c0_0, %c0_1, %c0_2] : memref<1x2x8x32xbf16, #tpu.memory_space<vmem>>, vector<1x2x8x32xbf16>
    %1 = vector.shape_cast %0 : vector<1x2x8x32xbf16> to vector<2x8x32xbf16>
    %2 = arith.extf %1 : vector<2x8x32xbf16> to vector<2x8x32xf32>
    %cst = arith.constant dense<0.000000e+00> : vector<2x8xf32>
    %3 = vector.multi_reduction <add>, %2, %cst [2] : vector<2x8x32xf32> to vector<2x8xf32>
    %4 = vector.shape_cast %3 : vector<2x8xf32> to vector<2x8x1xf32>
    %cst_3 = arith.constant 3.200000e+01 : f32
    %5 = vector.broadcast %cst_3 : f32 to vector<2x8x1xf32>
    %6 = arith.divf %4, %5 : vector<2x8x1xf32>
    %7 = vector.broadcast %6 : vector<2x8x1xf32> to vector<2x8x32xf32>
    %8 = arith.subf %2, %7 : vector<2x8x32xf32>
    %9 = arith.mulf %8, %8 : vector<2x8x32xf32>
    %cst_4 = arith.constant dense<0.000000e+00> : vector<2x8xf32>
    %10 = vector.multi_reduction <add>, %9, %cst_4 [2] : vector<2x8x32xf32> to vector<2x8xf32>
    %11 = vector.shape_cast %10 : vector<2x8xf32> to vector<2x8x1xf32>
    %cst_5 = arith.constant 3.200000e+01 : f32
    %12 = vector.broadcast %cst_5 : f32 to vector<2x8x1xf32>
    %13 = arith.divf %11, %12 : vector<2x8x1xf32>
    %c0_6 = arith.constant 0 : index
    %c0_7 = arith.constant 0 : index
    %c0_8 = arith.constant 0 : index
    %14 = vector.load %arg2[%c0_6, %c0_7, %c0_8] : memref<2x1x32xf32, #tpu.memory_space<vmem>>, vector<2x1x32xf32>
    %15 = vector.broadcast %6 : vector<2x8x1xf32> to vector<2x8x32xf32>
    %16 = arith.subf %2, %15 : vector<2x8x32xf32>
    %cst_9 = arith.constant 9.99999996E-13 : f32
    %17 = vector.broadcast %cst_9 : f32 to vector<2x8x1xf32>
    %18 = arith.addf %13, %17 : vector<2x8x1xf32>
    %19 = math.rsqrt %18 : vector<2x8x1xf32>
    %20 = vector.broadcast %19 : vector<2x8x1xf32> to vector<2x8x32xf32>
    %21 = arith.mulf %16, %20 : vector<2x8x32xf32>
    %22 = vector.broadcast %14 : vector<2x1x32xf32> to vector<2x8x32xf32>
    %23 = arith.mulf %22, %21 : vector<2x8x32xf32>
    %c0_10 = arith.constant 0 : index
    %c0_11 = arith.constant 0 : index
    %c0_12 = arith.constant 0 : index
    %24 = vector.load %arg3[%c0_10, %c0_11, %c0_12] : memref<2x1x32xf32, #tpu.memory_space<vmem>>, vector<2x1x32xf32>
    %25 = vector.broadcast %24 : vector<2x1x32xf32> to vector<2x8x32xf32>
    %26 = arith.addf %23, %25 : vector<2x8x32xf32>
    %27 = vector.extract_strided_slice %26 {offsets = [1, 0, 0], sizes = [1, 8, 32], strides = [1, 1, 1]} : vector<2x8x32xf32> to vector<1x8x32xf32>
    %28 = vector.shape_cast %27 : vector<1x8x32xf32> to vector<8x32xf32>
    %29 = vector.shape_cast %26 : vector<2x8x32xf32> to vector<16x32xf32>
    %30 = arith.truncf %29 : vector<16x32xf32> to vector<16x32xbf16>
    %c0_13 = arith.constant 0 : index
    %c0_14 = arith.constant 0 : index
    %31 = vector.load %arg4[%c0_13, %c0_14] : memref<32x96xbf16, #tpu.memory_space<vmem>>, vector<32x96xbf16>
    %cst_15 = arith.constant dense<0.000000e+00> : vector<16x96xf32>
    %32 = tpu.matmul %30, %31, %cst_15 {dimension_numbers = #tpu.dot_dimension_numbers<[1], [0], [0], [1], [0, 0, 1, 1], [], []>} : vector<16x32xbf16>, vector<32x96xbf16>, vector<16x96xf32> -> vector<16x96xf32>
    %c0_16 = arith.constant 0 : index
    %c0_17 = arith.constant 0 : index
    %33 = vector.load %arg5[%c0_16, %c0_17] : memref<1x96xf32, #tpu.memory_space<vmem>>, vector<1x96xf32>
    %34 = vector.shape_cast %33 : vector<1x96xf32> to vector<96xf32>
    %35 = vector.shape_cast %34 : vector<96xf32> to vector<1x96xf32>
    %36 = vector.broadcast %35 : vector<1x96xf32> to vector<16x96xf32>
    %37 = arith.addf %32, %36 : vector<16x96xf32>
    %38 = vector.extract_strided_slice %37 {offsets = [0, 0], sizes = [8, 96], strides = [1, 1]} : vector<16x96xf32> to vector<8x96xf32>
    %39 = vector.extract_strided_slice %37 {offsets = [8, 0], sizes = [8, 96], strides = [1, 1]} : vector<16x96xf32> to vector<8x96xf32>
    %40 = vector.extract_strided_slice %38 {offsets = [0, 32], sizes = [8, 32], strides = [1, 1]} : vector<8x96xf32> to vector<8x32xf32>
    %41 = vector.shape_cast %40 : vector<8x32xf32> to vector<8x4x8xf32>
    %42 = tpu.transpose %41, [1, 0, 2] : vector<8x4x8xf32> -> vector<4x8x8xf32>
    %43 = vector.extract_strided_slice %38 {offsets = [0, 64], sizes = [8, 32], strides = [1, 1]} : vector<8x96xf32> to vector<8x32xf32>
    %44 = vector.shape_cast %43 : vector<8x32xf32> to vector<8x4x8xf32>
    %45 = tpu.transpose %44, [1, 0, 2] : vector<8x4x8xf32> -> vector<4x8x8xf32>
    %46 = vector.extract_strided_slice %39 {offsets = [0, 0], sizes = [8, 32], strides = [1, 1]} : vector<8x96xf32> to vector<8x32xf32>
    %47 = vector.shape_cast %46 : vector<8x32xf32> to vector<8x4x8xf32>
    %48 = tpu.transpose %47, [1, 0, 2] : vector<8x4x8xf32> -> vector<4x8x8xf32>
    %49 = vector.extract_strided_slice %39 {offsets = [0, 32], sizes = [8, 32], strides = [1, 1]} : vector<8x96xf32> to vector<8x32xf32>
    %50 = vector.shape_cast %49 : vector<8x32xf32> to vector<8x4x8xf32>
    %51 = tpu.transpose %50, [1, 0, 2] : vector<8x4x8xf32> -> vector<4x8x8xf32>
    %52 = vector.extract_strided_slice %39 {offsets = [0, 64], sizes = [8, 32], strides = [1, 1]} : vector<8x96xf32> to vector<8x32xf32>
    %53 = vector.shape_cast %52 : vector<8x32xf32> to vector<8x4x8xf32>
    %54 = tpu.transpose %53, [1, 0, 2] : vector<8x4x8xf32> -> vector<4x8x8xf32>
    %55 = tpu.iota {dimensions = array<i32: 0>} : vector<8x8xi32>
    %56 = tpu.iota {dimensions = array<i32: 1>} : vector<8x8xi32>
    %57 = arith.cmpi sge, %55, %56 : vector<8x8xi32>
    %58 = arith.truncf %48 : vector<4x8x8xf32> to vector<4x8x8xbf16>
    %59 = arith.truncf %42 : vector<4x8x8xf32> to vector<4x8x8xbf16>
    "tpu.trace_start"() <{level = 10 : i32, message = "hqd,hkd->hqk"}> : () -> ()
    %cst_18 = arith.constant dense<0.000000e+00> : vector<4x8x8xf32>
    %60 = tpu.matmul %58, %59, %cst_18 {dimension_numbers = #tpu.dot_dimension_numbers<[2], [2], [1], [1], [0, 0, 0, 1, 1, 1], [0], [0]>} : vector<4x8x8xbf16>, vector<4x8x8xbf16>, vector<4x8x8xf32> -> vector<4x8x8xf32>
    "tpu.trace_stop"() : () -> ()
    %61 = vector.shape_cast %57 : vector<8x8xi1> to vector<1x8x8xi1>
    %cst_19 = arith.constant -1.000000e+10 : f32
    %62 = vector.shape_cast %61 : vector<1x8x8xi1> to vector<1x8x8xi1>
    %63 = vector.broadcast %62 : vector<1x8x8xi1> to vector<4x8x8xi1>
    %64 = vector.broadcast %cst_19 : f32 to vector<4x8x8xf32>
    %65 = arith.select %63, %60, %64 : vector<4x8x8xi1>, vector<4x8x8xf32>
    %66 = arith.mulf %48, %51 : vector<4x8x8xf32>
    %cst_20 = arith.constant dense<0.000000e+00> : vector<4x8xf32>
    %67 = vector.multi_reduction <add>, %66, %cst_20 [2] : vector<4x8x8xf32> to vector<4x8xf32>
    %68 = vector.shape_cast %67 : vector<4x8xf32> to vector<4x8x1xf32>
    %cst_21 = arith.constant dense<0xFF800000> : vector<4x8xf32>
    %69 = vector.multi_reduction <maximumf>, %65, %cst_21 [2] : vector<4x8x8xf32> to vector<4x8xf32>
    %70 = vector.shape_cast %69 : vector<4x8xf32> to vector<4x8x1xf32>
    %71 = arith.maximumf %70, %68 : vector<4x8x1xf32>
    %72 = vector.broadcast %71 : vector<4x8x1xf32> to vector<4x8x8xf32>
    %73 = arith.subf %65, %72 : vector<4x8x8xf32>
    %74 = math.exp %73 : vector<4x8x8xf32>
    %75 = arith.subf %68, %71 : vector<4x8x1xf32>
    %76 = math.exp %75 : vector<4x8x1xf32>
    %cst_22 = arith.constant dense<0.000000e+00> : vector<4x8xf32>
    %77 = vector.multi_reduction <add>, %74, %cst_22 [2] : vector<4x8x8xf32> to vector<4x8xf32>
    %78 = vector.shape_cast %77 : vector<4x8xf32> to vector<4x8x1xf32>
    %79 = arith.addf %78, %76 : vector<4x8x1xf32>
    %80 = tpu.reciprocal %79 {approx = true} : vector<4x8x1xf32> -> vector<4x8x1xf32>
    %81 = vector.broadcast %80 : vector<4x8x1xf32> to vector<4x8x8xf32>
    %82 = arith.mulf %74, %81 : vector<4x8x8xf32>
    %83 = arith.mulf %76, %80 : vector<4x8x1xf32>
    %84 = arith.truncf %82 : vector<4x8x8xf32> to vector<4x8x8xbf16>
    %85 = arith.truncf %45 : vector<4x8x8xf32> to vector<4x8x8xbf16>
    "tpu.trace_start"() <{level = 10 : i32, message = "hqk,hkd->hqd"}> : () -> ()
    %cst_23 = arith.constant dense<0.000000e+00> : vector<4x8x8xf32>
    %86 = tpu.matmul %84, %85, %cst_23 {dimension_numbers = #tpu.dot_dimension_numbers<[2], [1], [1], [2], [0, 0, 0, 1, 1, 2], [0], [0]>} : vector<4x8x8xbf16>, vector<4x8x8xbf16>, vector<4x8x8xf32> -> vector<4x8x8xf32>
    "tpu.trace_stop"() : () -> ()
    %87 = vector.broadcast %83 : vector<4x8x1xf32> to vector<4x8x8xf32>
    %88 = arith.mulf %87, %54 : vector<4x8x8xf32>
    %89 = arith.addf %86, %88 : vector<4x8x8xf32>
    %90 = tpu.transpose %89, [1, 0, 2] : vector<4x8x8xf32> -> vector<8x4x8xf32>
    %91 = vector.shape_cast %90 : vector<8x4x8xf32> to vector<8x32xf32>
    %92 = arith.cmpi eq, %55, %56 : vector<8x8xi32>
    %93 = vector.shape_cast %92 : vector<8x8xi1> to vector<1x8x8xi1>
    %cst_24 = arith.constant 0.000000e+00 : f32
    %94 = vector.shape_cast %93 : vector<1x8x8xi1> to vector<1x8x8xi1>
    %95 = vector.broadcast %94 : vector<1x8x8xi1> to vector<4x8x8xi1>
    %96 = vector.shape_cast %83 : vector<4x8x1xf32> to vector<4x8x1xf32>
    %97 = vector.broadcast %96 : vector<4x8x1xf32> to vector<4x8x8xf32>
    %98 = vector.broadcast %cst_24 : f32 to vector<4x8x8xf32>
    %99 = arith.select %95, %97, %98 : vector<4x8x8xi1>, vector<4x8x8xf32>
    %100 = tpu.concatenate %82, %99 in 2 : vector<4x8x8xf32>, vector<4x8x8xf32> -> vector<4x8x16xf32>
    %101 = arith.truncf %100 : vector<4x8x16xf32> to vector<4x8x16xbf16>
    %c0_25 = arith.constant 0 : index
    %c0_26 = arith.constant 0 : index
    %c0_27 = arith.constant 0 : index
    %c0_28 = arith.constant 0 : index
    %102 = vector.load %arg15[%c0_25, %c0_26, %c0_27, %c0_28] : memref<1x4x8x16xbf16, #tpu.memory_space<vmem>>, vector<1x4x8x16xbf16>
    %103 = vector.shape_cast %102 : vector<1x4x8x16xbf16> to vector<4x8x16xbf16>
    %104 = vector.shape_cast %101 : vector<4x8x16xbf16> to vector<1x4x8x16xbf16>
    tpu.vector_store %arg15[%c0_25, %c0_26, %c0_27, %c0_28], %104 {strides = array<i32>} : memref<1x4x8x16xbf16, #tpu.memory_space<vmem>>, vector<1x4x8x16xbf16>,
    %105 = arith.truncf %91 : vector<8x32xf32> to vector<8x32xbf16>
    %c0_29 = arith.constant 0 : index
    %c0_30 = arith.constant 0 : index
    %106 = vector.load %arg6[%c0_29, %c0_30] : memref<32x32xbf16, #tpu.memory_space<vmem>>, vector<32x32xbf16>
    %cst_31 = arith.constant dense<0.000000e+00> : vector<8x32xf32>
    %107 = tpu.matmul %105, %106, %cst_31 {dimension_numbers = #tpu.dot_dimension_numbers<[1], [0], [0], [1], [0, 0, 1, 1], [], []>} : vector<8x32xbf16>, vector<32x32xbf16>, vector<8x32xf32> -> vector<8x32xf32>
    %c0_32 = arith.constant 0 : index
    %c0_33 = arith.constant 0 : index
    %108 = vector.load %arg7[%c0_32, %c0_33] : memref<1x32xf32, #tpu.memory_space<vmem>>, vector<1x32xf32>
    %109 = vector.shape_cast %108 : vector<1x32xf32> to vector<32xf32>
    %110 = vector.shape_cast %109 : vector<32xf32> to vector<1x32xf32>
    %111 = vector.broadcast %110 : vector<1x32xf32> to vector<8x32xf32>
    %112 = arith.addf %107, %111 : vector<8x32xf32>
    %113 = arith.addf %28, %112 : vector<8x32xf32>
    %c0_34 = arith.constant 0 : index
    %c0_35 = arith.constant 0 : index
    %114 = vector.load %arg8[%c0_34, %c0_35] : memref<1x32xf32, #tpu.memory_space<vmem>>, vector<1x32xf32>
    %115 = vector.shape_cast %114 : vector<1x32xf32> to vector<32xf32>
    %c0_36 = arith.constant 0 : index
    %c0_37 = arith.constant 0 : index
    %116 = vector.load %arg9[%c0_36, %c0_37] : memref<1x32xf32, #tpu.memory_space<vmem>>, vector<1x32xf32>
    %117 = vector.shape_cast %116 : vector<1x32xf32> to vector<32xf32>
    %cst_38 = arith.constant dense<0.000000e+00> : vector<8xf32>
    %118 = vector.multi_reduction <add>, %113, %cst_38 [1] : vector<8x32xf32> to vector<8xf32>
    %119 = vector.shape_cast %118 : vector<8xf32> to vector<8x1xf32>
    %cst_39 = arith.constant 3.200000e+01 : f32
    %120 = vector.broadcast %cst_39 : f32 to vector<8x1xf32>
    %121 = arith.divf %119, %120 : vector<8x1xf32>
    %122 = vector.broadcast %121 : vector<8x1xf32> to vector<8x32xf32>
    %123 = arith.subf %113, %122 : vector<8x32xf32>
    %124 = arith.mulf %123, %123 : vector<8x32xf32>
    %cst_40 = arith.constant dense<0.000000e+00> : vector<8xf32>
    %125 = vector.multi_reduction <add>, %124, %cst_40 [1] : vector<8x32xf32> to vector<8xf32>
    %126 = vector.shape_cast %125 : vector<8xf32> to vector<8x1xf32>
    %cst_41 = arith.constant 3.200000e+01 : f32
    %127 = vector.broadcast %cst_41 : f32 to vector<8x1xf32>
    %128 = arith.divf %126, %127 : vector<8x1xf32>
    %129 = vector.broadcast %121 : vector<8x1xf32> to vector<8x32xf32>
    %130 = arith.subf %113, %129 : vector<8x32xf32>
    %cst_42 = arith.constant 9.99999996E-13 : f32
    %131 = vector.broadcast %cst_42 : f32 to vector<8x1xf32>
    %132 = arith.addf %128, %131 : vector<8x1xf32>
    %133 = math.rsqrt %132 : vector<8x1xf32>
    %134 = vector.broadcast %133 : vector<8x1xf32> to vector<8x32xf32>
    %135 = arith.mulf %130, %134 : vector<8x32xf32>
    %136 = vector.shape_cast %115 : vector<32xf32> to vector<1x32xf32>
    %137 = vector.broadcast %136 : vector<1x32xf32> to vector<8x32xf32>
    %138 = arith.mulf %137, %135 : vector<8x32xf32>
    %139 = vector.shape_cast %117 : vector<32xf32> to vector<1x32xf32>
    %140 = vector.broadcast %139 : vector<1x32xf32> to vector<8x32xf32>
    %141 = arith.addf %138, %140 : vector<8x32xf32>
    %142 = arith.truncf %141 : vector<8x32xf32> to vector<8x32xbf16>
    %c0_43 = arith.constant 0 : index
    %c0_44 = arith.constant 0 : index
    %143 = vector.load %arg10[%c0_43, %c0_44] : memref<32x128xbf16, #tpu.memory_space<vmem>>, vector<32x128xbf16>
    %cst_45 = arith.constant dense<0.000000e+00> : vector<8x128xf32>
    %144 = tpu.matmul %142, %143, %cst_45 {dimension_numbers = #tpu.dot_dimension_numbers<[1], [0], [0], [1], [0, 0, 1, 1], [], []>} : vector<8x32xbf16>, vector<32x128xbf16>, vector<8x128xf32> -> vector<8x128xf32>
    %c0_46 = arith.constant 0 : index
    %c0_47 = arith.constant 0 : index
    %145 = vector.load %arg11[%c0_46, %c0_47] : memref<1x128xf32, #tpu.memory_space<vmem>>, vector<1x128xf32>
    %146 = vector.shape_cast %145 : vector<1x128xf32> to vector<128xf32>
    %147 = vector.shape_cast %146 : vector<128xf32> to vector<1x128xf32>
    %148 = vector.broadcast %147 : vector<1x128xf32> to vector<8x128xf32>
    %149 = arith.addf %144, %148 : vector<8x128xf32>
    %cst_48 = arith.constant 5.000000e-01 : f32
    %150 = vector.broadcast %cst_48 : f32 to vector<8x128xf32>
    %151 = arith.mulf %150, %149 : vector<8x128xf32>
    %152 = arith.mulf %149, %149 : vector<8x128xf32>
    %153 = arith.mulf %149, %152 : vector<8x128xf32>
    %cst_49 = arith.constant 4.471500e-02 : f32
    %154 = vector.broadcast %cst_49 : f32 to vector<8x128xf32>
    %155 = arith.mulf %154, %153 : vector<8x128xf32>
    %156 = arith.addf %149, %155 : vector<8x128xf32>
    %cst_50 = arith.constant 0.797884583 : f32
    %157 = vector.broadcast %cst_50 : f32 to vector<8x128xf32>
    %158 = arith.mulf %157, %156 : vector<8x128xf32>
    %159 = math.tanh %158 : vector<8x128xf32>
    %cst_51 = arith.constant 1.000000e+00 : f32
    %160 = vector.broadcast %cst_51 : f32 to vector<8x128xf32>
    %161 = arith.addf %160, %159 : vector<8x128xf32>
    %162 = arith.mulf %151, %161 : vector<8x128xf32>
    %163 = arith.truncf %162 : vector<8x128xf32> to vector<8x128xbf16>
    %c0_52 = arith.constant 0 : index
    %c0_53 = arith.constant 0 : index
    %164 = vector.load %arg12[%c0_52, %c0_53] : memref<128x32xbf16, #tpu.memory_space<vmem>>, vector<128x32xbf16>
    %cst_54 = arith.constant dense<0.000000e+00> : vector<8x32xf32>
    %165 = tpu.matmul %163, %164, %cst_54 {dimension_numbers = #tpu.dot_dimension_numbers<[1], [0], [0], [1], [0, 0, 1, 1], [], []>} : vector<8x128xbf16>, vector<128x32xbf16>, vector<8x32xf32> -> vector<8x32xf32>
    %c0_55 = arith.constant 0 : index
    %c0_56 = arith.constant 0 : index
    %166 = vector.load %arg13[%c0_55, %c0_56] : memref<1x32xf32, #tpu.memory_space<vmem>>, vector<1x32xf32>
    %167 = vector.shape_cast %166 : vector<1x32xf32> to vector<32xf32>
    %168 = vector.shape_cast %167 : vector<32xf32> to vector<1x32xf32>
    %169 = vector.broadcast %168 : vector<1x32xf32> to vector<8x32xf32>
    %170 = arith.addf %165, %169 : vector<8x32xf32>
    %171 = arith.addf %113, %170 : vector<8x32xf32>
    %c0_57 = arith.constant 0 : index
    %c0_58 = arith.constant 0 : index
    %c0_59 = arith.constant 0 : index
    %172 = vector.load %arg14[%c0_57, %c0_58, %c0_59] : memref<1x8x32xf32, #tpu.memory_space<vmem>>, vector<1x8x32xf32>
    %173 = vector.shape_cast %172 : vector<1x8x32xf32> to vector<8x32xf32>
    %174 = vector.shape_cast %171 : vector<8x32xf32> to vector<1x8x32xf32>
    tpu.vector_store %arg14[%c0_57, %c0_58, %c0_59], %174 {strides = array<i32>} : memref<1x8x32xf32, #tpu.memory_space<vmem>>, vector<1x8x32xf32>,
    return
  }
  func.func @transform_0(%arg0: i32) -> (i32, i32, i32, i32) {
    %c0_i32 = arith.constant 0 : i32
    %c0_i32_0 = arith.constant 0 : i32
    %c0_i32_1 = arith.constant 0 : i32
    %c0_i32_2 = arith.constant 0 : i32
    return %arg0, %c0_i32, %c0_i32_0, %c0_i32_1 : i32, i32, i32, i32
  }
  func.func @transform_1(%arg0: i32) -> (i32, i32, i32) {
    %c0_i32 = arith.constant 0 : i32
    %c0_i32_0 = arith.constant 0 : i32
    %c0_i32_1 = arith.constant 0 : i32
    %c0_i32_2 = arith.constant 0 : i32
    return %c0_i32, %c0_i32_0, %c0_i32_1 : i32, i32, i32
  }
  func.func @transform_2(%arg0: i32) -> (i32, i32, i32) {
    %c0_i32 = arith.constant 0 : i32
    %c0_i32_0 = arith.constant 0 : i32
    %c0_i32_1 = arith.constant 0 : i32
    %c0_i32_2 = arith.constant 0 : i32
    return %c0_i32, %c0_i32_0, %c0_i32_1 : i32, i32, i32
  }
  func.func @transform_3(%arg0: i32) -> (i32, i32) {
    %c0_i32 = arith.constant 0 : i32
    %c0_i32_0 = arith.constant 0 : i32
    %c0_i32_1 = arith.constant 0 : i32
    return %c0_i32, %c0_i32_0 : i32, i32
  }
  func.func @transform_4(%arg0: i32) -> (i32, i32) {
    %c0_i32 = arith.constant 0 : i32
    %c0_i32_0 = arith.constant 0 : i32
    %c0_i32_1 = arith.constant 0 : i32
    return %c0_i32, %c0_i32_0 : i32, i32
  }
  func.func @transform_5(%arg0: i32) -> (i32, i32) {
    %c0_i32 = arith.constant 0 : i32
    %c0_i32_0 = arith.constant 0 : i32
    %c0_i32_1 = arith.constant 0 : i32
    return %c0_i32, %c0_i32_0 : i32, i32
  }
  func.func @transform_6(%arg0: i32) -> (i32, i32) {
    %c0_i32 = arith.constant 0 : i32
    %c0_i32_0 = arith.constant 0 : i32
    %c0_i32_1 = arith.constant 0 : i32
    return %c0_i32, %c0_i32_0 : i32, i32
  }
  func.func @transform_7(%arg0: i32) -> (i32, i32) {
    %c0_i32 = arith.constant 0 : i32
    %c0_i32_0 = arith.constant 0 : i32
    %c0_i32_1 = arith.constant 0 : i32
    return %c0_i32, %c0_i32_0 : i32, i32
  }
  func.func @transform_8(%arg0: i32) -> (i32, i32) {
    %c0_i32 = arith.constant 0 : i32
    %c0_i32_0 = arith.constant 0 : i32
    %c0_i32_1 = arith.constant 0 : i32
    return %c0_i32, %c0_i32_0 : i32, i32
  }
  func.func @transform_9(%arg0: i32) -> (i32, i32) {
    %c0_i32 = arith.constant 0 : i32
    %c0_i32_0 = arith.constant 0 : i32
    %c0_i32_1 = arith.constant 0 : i32
    return %c0_i32, %c0_i32_0 : i32, i32
  }
  func.func @transform_10(%arg0: i32) -> (i32, i32) {
    %c0_i32 = arith.constant 0 : i32
    %c0_i32_0 = arith.constant 0 : i32
    %c0_i32_1 = arith.constant 0 : i32
    return %c0_i32, %c0_i32_0 : i32, i32
  }
  func.func @transform_11(%arg0: i32) -> (i32, i32) {
    %c0_i32 = arith.constant 0 : i32
    %c0_i32_0 = arith.constant 0 : i32
    %c0_i32_1 = arith.constant 0 : i32
    return %c0_i32, %c0_i32_0 : i32, i32
  }
  func.func @transform_12(%arg0: i32) -> (i32, i32) {
    %c0_i32 = arith.constant 0 : i32
    %c0_i32_0 = arith.constant 0 : i32
    %c0_i32_1 = arith.constant 0 : i32
    return %c0_i32, %c0_i32_0 : i32, i32
  }
  func.func @transform_13(%arg0: i32) -> (i32, i32, i32) {
    %c0_i32 = arith.constant 0 : i32
    %c0_i32_0 = arith.constant 0 : i32
    %c0_i32_1 = arith.constant 0 : i32
    return %arg0, %c0_i32, %c0_i32_0 : i32, i32, i32
  }
  func.func @transform_14(%arg0: i32) -> (i32, i32, i32, i32) {
    %c0_i32 = arith.constant 0 : i32
    %c0_i32_0 = arith.constant 0 : i32
    %c0_i32_1 = arith.constant 0 : i32
    %c0_i32_2 = arith.constant 0 : i32
    return %arg0, %c0_i32, %c0_i32_0, %c0_i32_1 : i32, i32, i32, i32
  }
}

</mosaic_0001>

<llo_original>
// kernel: tpu_custom_call.1
$region0: #{tpu_custom_call.1}
  #allocation0 [shape = 'u32[]', space=smem, size = 0x4, offset = 0x4, fixed_abs, tag = 'smem constant byte address 0x4 - core index']
  #allocation1 [shape = 'u32[72,128]{1,0:T(1,128)}', space=vmem, size = 0x9000, scoped, tag = 'internal scratch']
  %s0 = inlined_call_operand.vmem [shape: bf16[2,2,8,32], index: 0, kind: input, shape index: {}]
  %s1 = inlined_call_operand.vmem [shape: f32[2,1,32], index: 1, kind: input, shape index: {}]
  %s2 = inlined_call_operand.vmem [shape: f32[2,1,32], index: 2, kind: input, shape index: {}]
  %s3 = inlined_call_operand.vmem [shape: bf16[32,96], index: 3, kind: input, shape index: {}]
  %s4 = inlined_call_operand.vmem [shape: f32[1,96], index: 4, kind: input, shape index: {}]
  %s5 = inlined_call_operand.vmem [shape: bf16[32,32], index: 5, kind: input, shape index: {}]
  %s6 = inlined_call_operand.vmem [shape: f32[1,32], index: 6, kind: input, shape index: {}]
  %s7 = inlined_call_operand.vmem [shape: f32[1,32], index: 7, kind: input, shape index: {}]
  %s8 = inlined_call_operand.vmem [shape: f32[1,32], index: 8, kind: input, shape index: {}]
  %s9 = inlined_call_operand.vmem [shape: bf16[32,128], index: 9, kind: input, shape index: {}]
  %s10 = inlined_call_operand.vmem [shape: f32[1,128], index: 10, kind: input, shape index: {}]
  %s11 = inlined_call_operand.vmem [shape: bf16[128,32], index: 11, kind: input, shape index: {}]
  %s12 = inlined_call_operand.vmem [shape: f32[1,32], index: 12, kind: input, shape index: {}]
  %s13 = inlined_call_operand.hbm [shape: f32[2,8,32], index: 13, kind: output, shape index: {0}]
  %s14 = inlined_call_operand.hbm [shape: bf16[2,4,8,16], index: 14, kind: output, shape index: {1}]
  %15 = xla_tuple %s13, %s14
  %s16 = sld [smem:[#allocation0]]
  $region93: #{tpu_custom_call.1} parent=0
    _
  %s18 = ssub.s32 1, %s16
  %s19 = scalar_select 0, %s18, %s16
  $region1: #{tpu_custom_call.1} parent=0
    #allocation2 [shape = 'u8[8192]{0}', space=vmem, size = 0x2000, scoped, tag = 'output window, operand 0']
    #allocation3 [shape = 's32[2]{0}', space=sflag, size = 0x8, scoped, tag = 'scoped memory for tpu_custom_call.1']
    #allocation4 [shape = 'u8[16384]{0}', space=vmem, size = 0x4000, scoped, tag = 'output window, operand 1']
    #allocation5 [shape = 's32[2]{0}', space=sflag, size = 0x8, scoped, tag = 'scoped memory for tpu_custom_call.1']
    %20 = vsyncpa [#allocation3], 0
    %s21 = scalar_lea.sflag [#allocation3], 1
    %22 = vsyncpa %s21, 0
    %23 = vsyncpa [#allocation5], 0
    %s24 = scalar_lea.sflag [#allocation5], 1
    %25 = vsyncpa %s24, 0
    loop: start=0, step=1, limit=4
    $region2: #{tpu_custom_call.1} parent=1 // loop_pre_header
      _
    $region3: #{tpu_custom_call.1} parent=1 // loop_header
      %s27 = sphi 0, %s31
      %p28 = scmp.ge.s32.totalorder %s27, 4
      %s37 = sphi 0, %s39
      %s40 = sphi 0, %s37
      %s41 = sphi 0, %s40
      %s57 = sphi 0, %s41
      %s61 = sphi 0, %s61
      %s63 = sphi 0, %s61
      %s64 = sphi 0, %s63
      %s78 = sphi 0, %s64
      %s82 = sphi 0, %s82
      %s84 = sphi 0, %s82
      %s85 = sphi 0, %s84
      %s99 = sphi 0, %s85
      %s103 = sphi 0, %s103
      %s105 = sphi 0, %s103
      %s106 = sphi 0, %s105
      %s120 = sphi 0, %s106
      %s124 = sphi 0, %s124
      %s126 = sphi 0, %s124
      %s127 = sphi 0, %s126
      %s141 = sphi 0, %s127
      %s145 = sphi 0, %s145
      %s147 = sphi 0, %s145
      %s148 = sphi 0, %s147
      %s162 = sphi 0, %s148
      %s166 = sphi 0, %s166
      %s168 = sphi 0, %s166
      %s169 = sphi 0, %s168
      %s183 = sphi 0, %s169
      %s187 = sphi 0, %s187
      %s189 = sphi 0, %s187
      %s190 = sphi 0, %s189
      %s204 = sphi 0, %s190
      %s208 = sphi 0, %s208
      %s210 = sphi 0, %s208
      %s211 = sphi 0, %s210
      %s225 = sphi 0, %s211
      %s229 = sphi 0, %s229
      %s231 = sphi 0, %s229
      %s232 = sphi 0, %s231
      %s246 = sphi 0, %s232
      %s250 = sphi 0, %s250
      %s252 = sphi 0, %s250
      %s253 = sphi 0, %s252
      %s267 = sphi 0, %s253
      %s271 = sphi 0, %s271
      %s273 = sphi 0, %s271
      %s274 = sphi 0, %s273
      %s288 = sphi 0, %s274
      %s292 = sphi 0, %s292
      %s294 = sphi 0, %s292
      %s295 = sphi 0, %s294
      %s309 = sphi 0, %s295
      %s315 = sphi 0, %s317
      %s318 = sphi 0, %s315
      %s319 = sphi 0, %s318
      %s335 = sphi 0, %s319
      %s341 = sphi 0, %s343
      %s344 = sphi 0, %s341
      %s345 = sphi 0, %s344
      %s361 = sphi 0, %s345
    $region4: #{tpu_custom_call.1} parent=1 // loop_header_branch
      %30 = sbr.rel (%p28) target = $region8
    $region5: #{tpu_custom_call.1} parent=1 // loop_body
      %s32 = ssub.s32 %s27, 1
      %s33 = ssub.s32 %s27, 2
      %s34 = sadd.s32 %s27, 1
      %s35 = ssub.s32 %s27, %s34
      %p36 = scmp.eq.s32.totalorder %s35, 0
      %s38 = sadd.s32 %s37, 1
      %s39 = scalar_select %p36, %s37, %s38
      %p42 = pneg %p36
      %p43 = scmp.eq.s32.totalorder %s27, 1
      %p44 = por %p42, %p43
      %p45 = scmp.ne.s32.totalorder %s37, %s40
      %p46 = scmp.eq.s32.totalorder %s27, 0
      %p47 = por %p45, %p46
      %p48 = scmp.ne.s32.totalorder %s37, %s40
      %p49 = scmp.eq.s32.totalorder %s32, 1
      %p50 = por %p48, %p49
      %p51 = scmp.ne.s32.totalorder %s40, %s41
      %p52 = scmp.eq.s32.totalorder %s32, 0
      %p53 = por %p51, %p52
      %p54 = scmp.ne.s32.totalorder %s40, %s41
      %p55 = scmp.eq.s32.totalorder %s33, 1
      %p56 = por %p54, %p55
      %p58 = scmp.ne.s32.totalorder %s41, %s57
      %p59 = scmp.eq.s32.totalorder %s33, 0
      %p60 = por %p58, %p59
      %s62 = sadd.s32 %s61, 1
      %p65 = scmp.eq.s32.totalorder %s27, 1
      %p66 = scmp.ne.s32.totalorder %s61, %s63
      %p67 = scmp.eq.s32.totalorder %s27, 0
      %p68 = por %p66, %p67
      %p69 = scmp.ne.s32.totalorder %s61, %s63
      %p70 = scmp.eq.s32.totalorder %s32, 1
      %p71 = por %p69, %p70
      %p72 = scmp.ne.s32.totalorder %s63, %s64
      %p73 = scmp.eq.s32.totalorder %s32, 0
      %p74 = por %p72, %p73
      %p75 = scmp.ne.s32.totalorder %s63, %s64
      %p76 = scmp.eq.s32.totalorder %s33, 1
      %p77 = por %p75, %p76
      %p79 = scmp.ne.s32.totalorder %s64, %s78
      %p80 = scmp.eq.s32.totalorder %s33, 0
      %p81 = por %p79, %p80
      %s83 = sadd.s32 %s82, 1
      %p86 = scmp.eq.s32.totalorder %s27, 1
      %p87 = scmp.ne.s32.totalorder %s82, %s84
      %p88 = scmp.eq.s32.totalorder %s27, 0
      %p89 = por %p87, %p88
      %p90 = scmp.ne.s32.totalorder %s82, %s84
      %p91 = scmp.eq.s32.totalorder %s32, 1
      %p92 = por %p90, %p91
      %p93 = scmp.ne.s32.totalorder %s84, %s85
      %p94 = scmp.eq.s32.totalorder %s32, 0
      %p95 = por %p93, %p94
      %p96 = scmp.ne.s32.totalorder %s84, %s85
      %p97 = scmp.eq.s32.totalorder %s33, 1
      %p98 = por %p96, %p97
      %p100 = scmp.ne.s32.totalorder %s85, %s99
      %p101 = scmp.eq.s32.totalorder %s33, 0
      %p102 = por %p100, %p101
      %s104 = sadd.s32 %s103, 1
      %p107 = scmp.eq.s32.totalorder %s27, 1
      %p108 = scmp.ne.s32.totalorder %s103, %s105
      %p109 = scmp.eq.s32.totalorder %s27, 0
      %p110 = por %p108, %p109
      %p111 = scmp.ne.s32.totalorder %s103, %s105
      %p112 = scmp.eq.s32.totalorder %s32, 1
      %p113 = por %p111, %p112
      %p114 = scmp.ne.s32.totalorder %s105, %s106
      %p115 = scmp.eq.s32.totalorder %s32, 0
      %p116 = por %p114, %p115
      %p117 = scmp.ne.s32.totalorder %s105, %s106
      %p118 = scmp.eq.s32.totalorder %s33, 1
      %p119 = por %p117, %p118
      %p121 = scmp.ne.s32.totalorder %s106, %s120
      %p122 = scmp.eq.s32.totalorder %s33, 0
      %p123 = por %p121, %p122
      %s125 = sadd.s32 %s124, 1
      %p128 = scmp.eq.s32.totalorder %s27, 1
      %p129 = scmp.ne.s32.totalorder %s124, %s126
      %p130 = scmp.eq.s32.totalorder %s27, 0
      %p131 = por %p129, %p130
      %p132 = scmp.ne.s32.totalorder %s124, %s126
      %p133 = scmp.eq.s32.totalorder %s32, 1
      %p134 = por %p132, %p133
      %p135 = scmp.ne.s32.totalorder %s126, %s127
      %p136 = scmp.eq.s32.totalorder %s32, 0
      %p137 = por %p135, %p136
      %p138 = scmp.ne.s32.totalorder %s126, %s127
      %p139 = scmp.eq.s32.totalorder %s33, 1
      %p140 = por %p138, %p139
      %p142 = scmp.ne.s32.totalorder %s127, %s141
      %p143 = scmp.eq.s32.totalorder %s33, 0
      %p144 = por %p142, %p143
      %s146 = sadd.s32 %s145, 1
      %p149 = scmp.eq.s32.totalorder %s27, 1
      %p150 = scmp.ne.s32.totalorder %s145, %s147
      %p151 = scmp.eq.s32.totalorder %s27, 0
      %p152 = por %p150, %p151
      %p153 = scmp.ne.s32.totalorder %s145, %s147
      %p154 = scmp.eq.s32.totalorder %s32, 1
      %p155 = por %p153, %p154
      %p156 = scmp.ne.s32.totalorder %s147, %s148
      %p157 = scmp.eq.s32.totalorder %s32, 0
      %p158 = por %p156, %p157
      %p159 = scmp.ne.s32.totalorder %s147, %s148
      %p160 = scmp.eq.s32.totalorder %s33, 1
      %p161 = por %p159, %p160
      %p163 = scmp.ne.s32.totalorder %s148, %s162
      %p164 = scmp.eq.s32.totalorder %s33, 0
      %p165 = por %p163, %p164
      %s167 = sadd.s32 %s166, 1
      %p170 = scmp.eq.s32.totalorder %s27, 1
      %p171 = scmp.ne.s32.totalorder %s166, %s168
      %p172 = scmp.eq.s32.totalorder %s27, 0
      %p173 = por %p171, %p172
      %p174 = scmp.ne.s32.totalorder %s166, %s168
      %p175 = scmp.eq.s32.totalorder %s32, 1
      %p176 = por %p174, %p175
      %p177 = scmp.ne.s32.totalorder %s168, %s169
      %p178 = scmp.eq.s32.totalorder %s32, 0
      %p179 = por %p177, %p178
      %p180 = scmp.ne.s32.totalorder %s168, %s169
      %p181 = scmp.eq.s32.totalorder %s33, 1
      %p182 = por %p180, %p181
      %p184 = scmp.ne.s32.totalorder %s169, %s183
      %p185 = scmp.eq.s32.totalorder %s33, 0
      %p186 = por %p184, %p185
      %s188 = sadd.s32 %s187, 1
      %p191 = scmp.eq.s32.totalorder %s27, 1
      %p192 = scmp.ne.s32.totalorder %s187, %s189
      %p193 = scmp.eq.s32.totalorder %s27, 0
      %p194 = por %p192, %p193
      %p195 = scmp.ne.s32.totalorder %s187, %s189
      %p196 = scmp.eq.s32.totalorder %s32, 1
      %p197 = por %p195, %p196
      %p198 = scmp.ne.s32.totalorder %s189, %s190
      %p199 = scmp.eq.s32.totalorder %s32, 0
      %p200 = por %p198, %p199
      %p201 = scmp.ne.s32.totalorder %s189, %s190
      %p202 = scmp.eq.s32.totalorder %s33, 1
      %p203 = por %p201, %p202
      %p205 = scmp.ne.s32.totalorder %s190, %s204
      %p206 = scmp.eq.s32.totalorder %s33, 0
      %p207 = por %p205, %p206
      %s209 = sadd.s32 %s208, 1
      %p212 = scmp.eq.s32.totalorder %s27, 1
      %p213 = scmp.ne.s32.totalorder %s208, %s210
      %p214 = scmp.eq.s32.totalorder %s27, 0
      %p215 = por %p213, %p214
      %p216 = scmp.ne.s32.totalorder %s208, %s210
      %p217 = scmp.eq.s32.totalorder %s32, 1
      %p218 = por %p216, %p217
      %p219 = scmp.ne.s32.totalorder %s210, %s211
      %p220 = scmp.eq.s32.totalorder %s32, 0
      %p221 = por %p219, %p220
      %p222 = scmp.ne.s32.totalorder %s210, %s211
      %p223 = scmp.eq.s32.totalorder %s33, 1
      %p224 = por %p222, %p223
      %p226 = scmp.ne.s32.totalorder %s211, %s225
      %p227 = scmp.eq.s32.totalorder %s33, 0
      %p228 = por %p226, %p227
      %s230 = sadd.s32 %s229, 1
      %p233 = scmp.eq.s32.totalorder %s27, 1
      %p234 = scmp.ne.s32.totalorder %s229, %s231
      %p235 = scmp.eq.s32.totalorder %s27, 0
      %p236 = por %p234, %p235
      %p237 = scmp.ne.s32.totalorder %s229, %s231
      %p238 = scmp.eq.s32.totalorder %s32, 1
      %p239 = por %p237, %p238
      %p240 = scmp.ne.s32.totalorder %s231, %s232
      %p241 = scmp.eq.s32.totalorder %s32, 0
      %p242 = por %p240, %p241
      %p243 = scmp.ne.s32.totalorder %s231, %s232
      %p244 = scmp.eq.s32.totalorder %s33, 1
      %p245 = por %p243, %p244
      %p247 = scmp.ne.s32.totalorder %s232, %s246
      %p248 = scmp.eq.s32.totalorder %s33, 0
      %p249 = por %p247, %p248
      %s251 = sadd.s32 %s250, 1
      %p254 = scmp.eq.s32.totalorder %s27, 1
      %p255 = scmp.ne.s32.totalorder %s250, %s252
      %p256 = scmp.eq.s32.totalorder %s27, 0
      %p257 = por %p255, %p256
      %p258 = scmp.ne.s32.totalorder %s250, %s252
      %p259 = scmp.eq.s32.totalorder %s32, 1
      %p260 = por %p258, %p259
      %p261 = scmp.ne.s32.totalorder %s252, %s253
      %p262 = scmp.eq.s32.totalorder %s32, 0
      %p263 = por %p261, %p262
      %p264 = scmp.ne.s32.totalorder %s252, %s253
      %p265 = scmp.eq.s32.totalorder %s33, 1
      %p266 = por %p264, %p265
      %p268 = scmp.ne.s32.totalorder %s253, %s267
      %p269 = scmp.eq.s32.totalorder %s33, 0
      %p270 = por %p268, %p269
      %s272 = sadd.s32 %s271, 1
      %p275 = scmp.eq.s32.totalorder %s27, 1
      %p276 = scmp.ne.s32.totalorder %s271, %s273
      %p277 = scmp.eq.s32.totalorder %s27, 0
      %p278 = por %p276, %p277
      %p279 = scmp.ne.s32.totalorder %s271, %s273
      %p280 = scmp.eq.s32.totalorder %s32, 1
      %p281 = por %p279, %p280
      %p282 = scmp.ne.s32.totalorder %s273, %s274
      %p283 = scmp.eq.s32.totalorder %s32, 0
      %p284 = por %p282, %p283
      %p285 = scmp.ne.s32.totalorder %s273, %s274
      %p286 = scmp.eq.s32.totalorder %s33, 1
      %p287 = por %p285, %p286
      %p289 = scmp.ne.s32.totalorder %s274, %s288
      %p290 = scmp.eq.s32.totalorder %s33, 0
      %p291 = por %p289, %p290
      %s293 = sadd.s32 %s292, 1
      %p296 = scmp.eq.s32.totalorder %s27, 1
      %p297 = scmp.ne.s32.totalorder %s292, %s294
      %p298 = scmp.eq.s32.totalorder %s27, 0
      %p299 = por %p297, %p298
      %p300 = scmp.ne.s32.totalorder %s292, %s294
      %p301 = scmp.eq.s32.totalorder %s32, 1
      %p302 = por %p300, %p301
      %p303 = scmp.ne.s32.totalorder %s294, %s295
      %p304 = scmp.eq.s32.totalorder %s32, 0
      %p305 = por %p303, %p304
      %p306 = scmp.ne.s32.totalorder %s294, %s295
      %p307 = scmp.eq.s32.totalorder %s33, 1
      %p308 = por %p306, %p307
      %p310 = scmp.ne.s32.totalorder %s295, %s309
      %p311 = scmp.eq.s32.totalorder %s33, 0
      %p312 = por %p310, %p311
      %s313 = ssub.s32 %s27, %s34
      %p314 = scmp.eq.s32.totalorder %s313, 0
      %s316 = sadd.s32 %s315, 1
      %s317 = scalar_select %p314, %s315, %s316
      %p320 = pneg %p314
      %p321 = scmp.eq.s32.totalorder %s27, 1
      %p322 = por %p320, %p321
      %p323 = scmp.ne.s32.totalorder %s315, %s318
      %p324 = scmp.eq.s32.totalorder %s27, 0
      %p325 = por %p323, %p324
      %p326 = scmp.ne.s32.totalorder %s315, %s318
      %p327 = scmp.eq.s32.totalorder %s32, 1
      %p328 = por %p326, %p327
      %p329 = scmp.ne.s32.totalorder %s318, %s319
      %p330 = scmp.eq.s32.totalorder %s32, 0
      %p331 = por %p329, %p330
      %p332 = scmp.ne.s32.totalorder %s318, %s319
      %p333 = scmp.eq.s32.totalorder %s33, 1
      %p334 = por %p332, %p333
      %p336 = scmp.ne.s32.totalorder %s319, %s335
      %p337 = scmp.eq.s32.totalorder %s33, 0
      %p338 = por %p336, %p337
      %s339 = ssub.s32 %s27, %s34
      %p340 = scmp.eq.s32.totalorder %s339, 0
      %s342 = sadd.s32 %s341, 1
      %s343 = scalar_select %p340, %s341, %s342
      %p346 = pneg %p340
      %p347 = scmp.eq.s32.totalorder %s27, 1
      %p348 = por %p346, %p347
      %p349 = scmp.ne.s32.totalorder %s341, %s344
      %p350 = scmp.eq.s32.totalorder %s27, 0
      %p351 = por %p349, %p350
      %p352 = scmp.ne.s32.totalorder %s341, %s344
      %p353 = scmp.eq.s32.totalorder %s32, 1
      %p354 = por %p352, %p353
      %p355 = scmp.ne.s32.totalorder %s344, %s345
      %p356 = scmp.eq.s32.totalorder %s32, 0
      %p357 = por %p355, %p356
      %p358 = scmp.ne.s32.totalorder %s344, %s345
      %p359 = scmp.eq.s32.totalorder %s33, 1
      %p360 = por %p358, %p359
      %p362 = scmp.ne.s32.totalorder %s345, %s361
      %p363 = scmp.eq.s32.totalorder %s33, 0
      %p364 = por %p362, %p363
      %p365 = scmp.le.s32.totalorder 1, %s27
      %p366 = scmp.lt.s32.totalorder %s27, 3
      %p367 = pnand %p365, %p366
      %p368 = pneg %p367
      // Predicated region
      $region9: #{tpu_custom_call.1} parent=5 // pred_check
        _
      $region10: #{tpu_custom_call.1} parent=5 // pred_check_branch
        %370 = sbr.rel (%p367) target = $region12
      $region11: #{tpu_custom_call.1} parent=5 // pred_region
        %s371 = ssub.s32 %s27, 1
        // Predicated region
        $region13: #{tpu_custom_call.1} parent=11 // pred_check
          %p372 = pneg %p74
        $region14: #{tpu_custom_call.1} parent=11 // pred_check_branch
          %374 = sbr.rel (%p372) target = $region16
        $region15: #{tpu_custom_call.1} parent=11 // pred_region
          _
        $region16: #{tpu_custom_call.1} parent=11 // pred_fallthru
          _
        // Predicated region
        $region17: #{tpu_custom_call.1} parent=11 // pred_check
          %p375 = pneg %p95
        $region18: #{tpu_custom_call.1} parent=11 // pred_check_branch
          %377 = sbr.rel (%p375) target = $region20
        $region19: #{tpu_custom_call.1} parent=11 // pred_region
          _
        $region20: #{tpu_custom_call.1} parent=11 // pred_fallthru
          _
        // Predicated region
        $region21: #{tpu_custom_call.1} parent=11 // pred_check
          %p378 = pneg %p116
        $region22: #{tpu_custom_call.1} parent=11 // pred_check_branch
          %380 = sbr.rel (%p378) target = $region24
        $region23: #{tpu_custom_call.1} parent=11 // pred_region
          _
        $region24: #{tpu_custom_call.1} parent=11 // pred_fallthru
          _
        // Predicated region
        $region25: #{tpu_custom_call.1} parent=11 // pred_check
          %p381 = pneg %p137
        $region26: #{tpu_custom_call.1} parent=11 // pred_check_branch
          %383 = sbr.rel (%p381) target = $region28
        $region27: #{tpu_custom_call.1} parent=11 // pred_region
          _
        $region28: #{tpu_custom_call.1} parent=11 // pred_fallthru
          _
        // Predicated region
        $region29: #{tpu_custom_call.1} parent=11 // pred_check
          %p384 = pneg %p158
        $region30: #{tpu_custom_call.1} parent=11 // pred_check_branch
          %386 = sbr.rel (%p384) target = $region32
        $region31: #{tpu_custom_call.1} parent=11 // pred_region
          _
        $region32: #{tpu_custom_call.1} parent=11 // pred_fallthru
          _
        // Predicated region
        $region33: #{tpu_custom_call.1} parent=11 // pred_check
          %p387 = pneg %p179
        $region34: #{tpu_custom_call.1} parent=11 // pred_check_branch
          %389 = sbr.rel (%p387) target = $region36
        $region35: #{tpu_custom_call.1} parent=11 // pred_region
          _
        $region36: #{tpu_custom_call.1} parent=11 // pred_fallthru
          _
        // Predicated region
        $region37: #{tpu_custom_call.1} parent=11 // pred_check
          %p390 = pneg %p200
        $region38: #{tpu_custom_call.1} parent=11 // pred_check_branch
          %392 = sbr.rel (%p390) target = $region40
        $region39: #{tpu_custom_call.1} parent=11 // pred_region
          _
        $region40: #{tpu_custom_call.1} parent=11 // pred_fallthru
          _
        // Predicated region
        $region41: #{tpu_custom_call.1} parent=11 // pred_check
          %p393 = pneg %p221
        $region42: #{tpu_custom_call.1} parent=11 // pred_check_branch
          %395 = sbr.rel (%p393) target = $region44
        $region43: #{tpu_custom_call.1} parent=11 // pred_region
          _
        $region44: #{tpu_custom_call.1} parent=11 // pred_fallthru
          _
        // Predicated region
        $region45: #{tpu_custom_call.1} parent=11 // pred_check
          %p396 = pneg %p242
        $region46: #{tpu_custom_call.1} parent=11 // pred_check_branch
          %398 = sbr.rel (%p396) target = $region48
        $region47: #{tpu_custom_call.1} parent=11 // pred_region
          _
        $region48: #{tpu_custom_call.1} parent=11 // pred_fallthru
          _
        // Predicated region
        $region49: #{tpu_custom_call.1} parent=11 // pred_check
          %p399 = pneg %p263
        $region50: #{tpu_custom_call.1} parent=11 // pred_check_branch
          %401 = sbr.rel (%p399) target = $region52
        $region51: #{tpu_custom_call.1} parent=11 // pred_region
          _
        $region52: #{tpu_custom_call.1} parent=11 // pred_fallthru
          _
        // Predicated region
        $region53: #{tpu_custom_call.1} parent=11 // pred_check
          %p402 = pneg %p284
        $region54: #{tpu_custom_call.1} parent=11 // pred_check_branch
          %404 = sbr.rel (%p402) target = $region56
        $region55: #{tpu_custom_call.1} parent=11 // pred_region
          _
        $region56: #{tpu_custom_call.1} parent=11 // pred_fallthru
          _
        // Predicated region
        $region57: #{tpu_custom_call.1} parent=11 // pred_check
          %p405 = pneg %p305
        $region58: #{tpu_custom_call.1} parent=11 // pred_check_branch
          %407 = sbr.rel (%p405) target = $region60
        $region59: #{tpu_custom_call.1} parent=11 // pred_region
          _
        $region60: #{tpu_custom_call.1} parent=11 // pred_fallthru
          _
      $region12: #{tpu_custom_call.1} parent=5 // pred_fallthru
        _
      %p408 = scmp.lt.s32.totalorder %s27, 2
      // Predicated region
      $region61: #{tpu_custom_call.1} parent=5 // pred_check
        %p409 = pneg %p408
      $region62: #{tpu_custom_call.1} parent=5 // pred_check_branch
        %411 = sbr.rel (%p409) target = $region64
      $region63: #{tpu_custom_call.1} parent=5 // pred_region
        // Predicated region
        $region65: #{tpu_custom_call.1} parent=63 // pred_check
          %p412 = pneg %p47
        $region66: #{tpu_custom_call.1} parent=63 // pred_check_branch
          %414 = sbr.rel (%p412) target = $region68
        $region67: #{tpu_custom_call.1} parent=63 // pred_region
          %p415 = scmp.lt.s32.totalorder %s27, 1
          %s416 = scalar_select %p415, %s27, 1
          %s417 = smul.addr %s416, 2
          %s418 = smul.addr %s417, 4
          %s419 = scalar_lea.vmem %s0, %s418
        $region68: #{tpu_custom_call.1} parent=63 // pred_fallthru
          _
      $region64: #{tpu_custom_call.1} parent=5 // pred_fallthru
        _
      %p420 = scmp.le.s32.totalorder 1, %s27
      %p421 = scmp.lt.s32.totalorder %s27, 3
      %p422 = pnand %p420, %p421
      %p423 = pneg %p422
      // Predicated region
      $region69: #{tpu_custom_call.1} parent=5 // pred_check
        _
      $region70: #{tpu_custom_call.1} parent=5 // pred_check_branch
        %425 = sbr.rel (%p422) target = $region72
      $region71: #{tpu_custom_call.1} parent=5 // pred_region
        %s426 = ssub.s32 %s27, 1
        %p427 = scmp.lt.s32.totalorder %s32, 1
        %s428 = scalar_select %p427, %s32, 1
        %s429 = smul.addr %s428, 2
        %s430 = smul.addr %s429, 4
        %s431 = scalar_lea.vmem %s0, %s430
        %p432 = pneg %p53
        %p433 = pneg %p50
        %p434 = pneg %p74
        %p435 = pneg %p71
        %p436 = pneg %p95
        %p437 = pneg %p92
        %p438 = pneg %p116
        %p439 = pneg %p113
        %p440 = pneg %p137
        %p441 = pneg %p134
        %p442 = pneg %p158
        %p443 = pneg %p155
        %p444 = pneg %p179
        %p445 = pneg %p176
        %p446 = pneg %p200
        %p447 = pneg %p197
        %p448 = pneg %p221
        %p449 = pneg %p218
        %p450 = pneg %p242
        %p451 = pneg %p239
        %p452 = pneg %p263
        %p453 = pneg %p260
        %p454 = pneg %p284
        %p455 = pneg %p281
        %p456 = pneg %p305
        %p457 = pneg %p302
        %p458 = pneg %p331
        %p459 = pneg %p328
        %s460 = sand.u32 %s318, 1
        %s461 = scalar_lea.sflag [#allocation3], %s460
        %s462 = sand.u32 %s318, 1
        %s463 = smul.addr %s462, 8
        %s464 = scalar_lea.vmem [#allocation2], %s463
        %p465 = pneg %p357
        %p466 = pneg %p354
        %s467 = sand.u32 %s344, 1
        %s468 = scalar_lea.sflag [#allocation5], %s467
        %s469 = sand.u32 %s344, 1
        %s470 = smul.addr %s469, 16
        %s471 = scalar_lea.vmem [#allocation4], %s470
        %p472 = scmp.lt.s32.totalorder %s32, 1
        %s473 = scalar_select %p472, %s32, 1
        %s474 = smul.addr %s473, 2
        %s475 = smul.addr %s474, 4
        %s476 = scalar_lea.vmem %s0, %s475
        %v478 = vld [vmem:[%s476] sm:$0xf]
        %v479 = vld [vmem:[%s476 + $0x4] sm:$0xf]
        %v480 = vunpack.c.l.bf16 %v478
        %v481 = vunpack.c.l.bf16 %v479
        %vm482 = vcmask 261120
        %v483 = vsel %vm482, %v480, 0.0
        %484 = vadd.xlane.f32.xlu0 %v483
        %v485 = vpop.xlane.xlu0 %484
        %v486 = vsel %vm482, %v481, 0.0
        %487 = vadd.xlane.f32.xlu0 %v486
        %v488 = vpop.xlane.xlu0 %487
        %v489 = vrcp.pop 32.0
        %v490 = vmul.f32 32.0, %v489
        %v491 = vsub.f32 1.0, %v490
        %v492 = vmul.f32 %v489, %v491
        %v493 = vadd.f32 %v489, %v492
        %vm494 = vweird.f32 %v489
        %v495 = vsel %vm494, %v489, %v493
        %v496 = vmul.f32 %v485, %v495
        %v497 = vmul.f32 %v488, %v495
        %v498 = vsub.f32 %v480, %v496
        %v499 = vsub.f32 %v481, %v497
        %v500 = vmul.f32 %v498, %v498
        %v501 = vmul.f32 %v499, %v499
        %v502 = vsel %vm482, %v500, 0.0
        %503 = vadd.xlane.f32.xlu0 %v502
        %v504 = vpop.xlane.xlu0 %503
        %v505 = vsel %vm482, %v501, 0.0
        %506 = vadd.xlane.f32.xlu0 %v505
        %v507 = vpop.xlane.xlu0 %506
        %v508 = vmul.f32 %v504, %v495
        %v509 = vmul.f32 %v507, %v495
        %v510 = vld [vmem:[%s1] sm:$0x1]
        %v511 = vld [vmem:[%s1 + $0x1] sm:$0x1]
        %v512 = vadd.f32 %v508, 1e-12
        %v513 = vadd.f32 %v509, 1e-12
        %v514 = vrsqrt.pop %v512
        %v515 = vmul.f32 %v514, %v512
        %v516 = vmul.f32 %v515, %v514
        %v517 = vmul.f32 0.5, %v516
        %v518 = vsub.f32 1.5, %v517
        %v519 = vmul.f32 %v514, %v518
        %vm520 = vweird.f32 %v512
        %vm521 = vweird.f32 %v514
        %vm522 = vmor %vm520, %vm521
        %v523 = vsel %vm522, %v514, %v519
        %v524 = vrsqrt.pop %v513
        %v525 = vmul.f32 %v524, %v513
        %v526 = vmul.f32 %v525, %v524
        %v527 = vmul.f32 0.5, %v526
        %v528 = vsub.f32 1.5, %v527
        %v529 = vmul.f32 %v524, %v528
        %vm530 = vweird.f32 %v513
        %vm531 = vweird.f32 %v524
        %vm532 = vmor %vm530, %vm531
        %v533 = vsel %vm532, %v524, %v529
        %v534 = vmul.f32 %v498, %v523
        %v535 = vmul.f32 %v499, %v533
        %v538 = vperm.slane %v510, 0
        %v539 = vperm.slane %v511, 0
        %v542 = vmul.f32 %v538, %v534
        %v543 = vmul.f32 %v539, %v535
        %v544 = vld [vmem:[%s2] sm:$0x1]
        %v545 = vld [vmem:[%s2 + $0x1] sm:$0x1]
        %v548 = vperm.slane %v544, 0
        %v549 = vperm.slane %v545, 0
        %v552 = vadd.f32 %v542, %v548
        %v553 = vadd.f32 %v543, %v549
        %v554 = vpack.c.bf16 %v553, %v552
        %v555 = vld [vmem:[%s3] sm:$0xf]
        %v556 = vld [vmem:[%s3 + $0x4] sm:$0xf]
        %v557 = vld [vmem:[%s3 + $0x8] sm:$0xf]
        %v558 = vld [vmem:[%s3 + $0xc] sm:$0xf]
        %v559 = vld [vmem:[%s4] sm:$0x1]
        %v561 = vperm.slane %v559, 0
        %v567 = vunpack.c.l.b16 %v555
        %v568 = vunpack.c.l.b16 %v556
        %v569 = vunpack.c.l.b16 %v557
        %v570 = vunpack.c.l.b16 %v558
        %v571 = vpack.c.b16 %v568, %v567
        %v572 = vpack.c.b16 %v570, %v569
        %v576 = vsel %vm482, %v554, 0
        %578 = vmatpush.bf16.msra.mxu0 0
        %579 = vmatpush.bf16.msra.mxu0 0
        %580 = vmatpush.bf16.msra.mxu0 0
        %581 = vmatpush.bf16.msra.mxu0 0
        %582 = vmatpush.bf16.msra.mxu0 0
        %583 = vmatpush.bf16.msra.mxu0 0
        %584 = vmatpush.bf16.msra.mxu0 %v572
        %585 = vmatpush.bf16.msra.mxu0 %v571
        %586 = vmatmul.bf16.gmra.mxu0 %v576
        %v587 = vpop.f32.mrf.mxu0
        %v588 = vadd.f32 %v561, %v587
        %v589 = vpop.f32.mrf.mxu0
        %v590 = vadd.f32 %v561, %v589
        %591 = vdwg.mxu0
        %593 = vrot.lane.b32.xlu0 %v588, 120
        %v594 = vpop.permute.xlu0 %593
        %595 = vrot.lane.b32.xlu0 %v588, 112
        %v596 = vpop.permute.xlu0 %595
        %597 = vrot.lane.b32.xlu0 %v588, 104
        %v598 = vpop.permute.xlu0 %597
        %599 = vrot.lane.b32.xlu0 %v588, 96
        %v600 = vpop.permute.xlu0 %599
        %601 = vrot.lane.b32.xlu0 %v594, 96
        %v602 = vpop.permute.xlu0 %601
        %603 = vrot.lane.b32.xlu0 %v596, 96
        %v604 = vpop.permute.xlu0 %603
        %605 = vrot.lane.b32.xlu0 %v598, 96
        %v606 = vpop.permute.xlu0 %605
        %v611 = vrot.slane %v604, 4
        %vm612 = vcmask 1047556
        %v613 = vsel %vm612, %v611, %v600
        %v614 = vrot.slane %v600, 4
        %v615 = vsel %vm612, %v604, %v614
        %v617 = vunpack.c.l.s4 1983009808
        %v618 = vunpack.c.0.s8 %v617
        %v619 = vperm.slane %v613, %v618
        %v621 = vunpack.c.l.s4 1983009808
        %v622 = vunpack.c.0.s8 %v621
        %v623 = vperm.slane %v615, %v622
        %v624 = vrot.slane %v606, 4
        %v625 = vsel %vm612, %v624, %v602
        %v626 = vrot.slane %v602, 4
        %v627 = vsel %vm612, %v606, %v626
        %v629 = vunpack.c.l.s4 1983009808
        %v630 = vunpack.c.0.s8 %v629
        %v631 = vperm.slane %v625, %v630
        %v633 = vunpack.c.l.s4 1983009808
        %v634 = vunpack.c.0.s8 %v633
        %v635 = vperm.slane %v627, %v634
        %v636 = vrot.slane %v631, 4
        %v637 = vsel %vm612, %v636, %v619
        %v638 = vrot.slane %v619, 4
        %v639 = vsel %vm612, %v631, %v638
        %v641 = vunpack.c.l.s4 1934713408
        %v642 = vunpack.c.0.s8 %v641
        %v643 = vperm.slane %v637, %v642
        %v645 = vunpack.c.l.s4 1934713408
        %v646 = vunpack.c.0.s8 %v645
        %v647 = vperm.slane %v639, %v646
        %v648 = vrot.slane %v635, 4
        %v649 = vsel %vm612, %v648, %v623
        %v650 = vrot.slane %v623, 4
        %v651 = vsel %vm612, %v635, %v650
        %v653 = vunpack.c.l.s4 1934713408
        %v654 = vunpack.c.0.s8 %v653
        %v655 = vperm.slane %v649, %v654
        %v657 = vunpack.c.l.s4 1934713408
        %v658 = vunpack.c.0.s8 %v657
        %v659 = vperm.slane %v651, %v658
        %v660 = vrot.slane %v643, 4
        %v661 = vsel %vm612, 0.0, %v660
        %v662 = vrot.slane %v647, 4
        %v663 = vsel %vm612, 0.0, %v662
        %v664 = vrot.slane %v655, 4
        %v665 = vsel %vm612, 0.0, %v664
        %v666 = vrot.slane %v659, 4
        %v667 = vsel %vm612, 0.0, %v666
        %v668 = vsel %vm612, %v662, %v643
        %v670 = vunpack.c.l.s4 1983009808
        %v671 = vunpack.c.0.s8 %v670
        %v672 = vperm.slane %v668, %v671
        %v673 = vrot.slane %v663, 4
        %v674 = vsel %vm612, %v673, %v661
        %v676 = vunpack.c.l.s4 1983009808
        %v677 = vunpack.c.0.s8 %v676
        %v678 = vperm.slane %v674, %v677
        %v679 = vsel %vm612, %v666, %v655
        %v681 = vunpack.c.l.s4 1983009808
        %v682 = vunpack.c.0.s8 %v681
        %v683 = vperm.slane %v679, %v682
        %v684 = vrot.slane %v667, 4
        %v685 = vsel %vm612, %v684, %v665
        %v687 = vunpack.c.l.s4 1983009808
        %v688 = vunpack.c.0.s8 %v687
        %v689 = vperm.slane %v685, %v688
        %v690 = vrot.slane %v678, 4
        %v691 = vsel %vm612, %v690, %v672
        %v692 = vrot.slane %v672, 4
        %v693 = vsel %vm612, %v678, %v692
        %v695 = vunpack.c.l.s4 1934713408
        %v696 = vunpack.c.0.s8 %v695
        %v697 = vperm.slane %v691, %v696
        %v699 = vunpack.c.l.s4 1934713408
        %v700 = vunpack.c.0.s8 %v699
        %v701 = vperm.slane %v693, %v700
        %v702 = vrot.slane %v689, 4
        %v703 = vsel %vm612, %v702, %v683
        %v704 = vrot.slane %v683, 4
        %v705 = vsel %vm612, %v689, %v704
        %v707 = vunpack.c.l.s4 1934713408
        %v708 = vunpack.c.0.s8 %v707
        %v709 = vperm.slane %v703, %v708
        %v711 = vunpack.c.l.s4 1934713408
        %v712 = vunpack.c.0.s8 %v711
        %v713 = vperm.slane %v705, %v712
        %v714 = vrot.slane %v709, 4
        %v715 = vsel %vm612, %v714, %v697
        %v716 = vrot.slane %v697, 4
        %v717 = vsel %vm612, %v709, %v716
        %v718 = vrot.slane %v713, 4
        %v719 = vsel %vm612, %v718, %v701
        %v720 = vrot.slane %v701, 4
        %v721 = vsel %vm612, %v713, %v720
        %722 = vrot.lane.b32.xlu0 %v588, 64
        %v723 = vpop.permute.xlu0 %722
        %724 = vrot.lane.b32.xlu0 %v594, 64
        %v725 = vpop.permute.xlu0 %724
        %726 = vrot.lane.b32.xlu0 %v596, 64
        %v727 = vpop.permute.xlu0 %726
        %728 = vrot.lane.b32.xlu0 %v598, 64
        %v729 = vpop.permute.xlu0 %728
        %v734 = vrot.slane %v727, 4
        %v735 = vsel %vm612, %v734, %v723
        %v736 = vrot.slane %v723, 4
        %v737 = vsel %vm612, %v727, %v736
        %v739 = vunpack.c.l.s4 1983009808
        %v740 = vunpack.c.0.s8 %v739
        %v741 = vperm.slane %v735, %v740
        %v743 = vunpack.c.l.s4 1983009808
        %v744 = vunpack.c.0.s8 %v743
        %v745 = vperm.slane %v737, %v744
        %v746 = vrot.slane %v729, 4
        %v747 = vsel %vm612, %v746, %v725
        %v748 = vrot.slane %v725, 4
        %v749 = vsel %vm612, %v729, %v748
        %v751 = vunpack.c.l.s4 1983009808
        %v752 = vunpack.c.0.s8 %v751
        %v753 = vperm.slane %v747, %v752
        %v755 = vunpack.c.l.s4 1983009808
        %v756 = vunpack.c.0.s8 %v755
        %v757 = vperm.slane %v749, %v756
        %v758 = vrot.slane %v753, 4
        %v759 = vsel %vm612, %v758, %v741
        %v760 = vrot.slane %v741, 4
        %v761 = vsel %vm612, %v753, %v760
        %v763 = vunpack.c.l.s4 1934713408
        %v764 = vunpack.c.0.s8 %v763
        %v765 = vperm.slane %v759, %v764
        %v767 = vunpack.c.l.s4 1934713408
        %v768 = vunpack.c.0.s8 %v767
        %v769 = vperm.slane %v761, %v768
        %v770 = vrot.slane %v757, 4
        %v771 = vsel %vm612, %v770, %v745
        %v772 = vrot.slane %v745, 4
        %v773 = vsel %vm612, %v757, %v772
        %v775 = vunpack.c.l.s4 1934713408
        %v776 = vunpack.c.0.s8 %v775
        %v777 = vperm.slane %v771, %v776
        %v779 = vunpack.c.l.s4 1934713408
        %v780 = vunpack.c.0.s8 %v779
        %v781 = vperm.slane %v773, %v780
        %v782 = vrot.slane %v765, 4
        %v783 = vsel %vm612, 0.0, %v782
        %v784 = vrot.slane %v769, 4
        %v785 = vsel %vm612, 0.0, %v784
        %v786 = vrot.slane %v777, 4
        %v787 = vsel %vm612, 0.0, %v786
        %v788 = vrot.slane %v781, 4
        %v789 = vsel %vm612, 0.0, %v788
        %v790 = vsel %vm612, %v784, %v765
        %v792 = vunpack.c.l.s4 1983009808
        %v793 = vunpack.c.0.s8 %v792
        %v794 = vperm.slane %v790, %v793
        %v795 = vrot.slane %v785, 4
        %v796 = vsel %vm612, %v795, %v783
        %v798 = vunpack.c.l.s4 1983009808
        %v799 = vunpack.c.0.s8 %v798
        %v800 = vperm.slane %v796, %v799
        %v801 = vsel %vm612, %v788, %v777
        %v803 = vunpack.c.l.s4 1983009808
        %v804 = vunpack.c.0.s8 %v803
        %v805 = vperm.slane %v801, %v804
        %v806 = vrot.slane %v789, 4
        %v807 = vsel %vm612, %v806, %v787
        %v809 = vunpack.c.l.s4 1983009808
        %v810 = vunpack.c.0.s8 %v809
        %v811 = vperm.slane %v807, %v810
        %v812 = vrot.slane %v800, 4
        %v813 = vsel %vm612, %v812, %v794
        %v814 = vrot.slane %v794, 4
        %v815 = vsel %vm612, %v800, %v814
        %v817 = vunpack.c.l.s4 1934713408
        %v818 = vunpack.c.0.s8 %v817
        %v819 = vperm.slane %v813, %v818
        %v821 = vunpack.c.l.s4 1934713408
        %v822 = vunpack.c.0.s8 %v821
        %v823 = vperm.slane %v815, %v822
        %v824 = vrot.slane %v811, 4
        %v825 = vsel %vm612, %v824, %v805
        %v826 = vrot.slane %v805, 4
        %v827 = vsel %vm612, %v811, %v826
        %v829 = vunpack.c.l.s4 1934713408
        %v830 = vunpack.c.0.s8 %v829
        %v831 = vperm.slane %v825, %v830
        %v833 = vunpack.c.l.s4 1934713408
        %v834 = vunpack.c.0.s8 %v833
        %v835 = vperm.slane %v827, %v834
        %v836 = vrot.slane %v831, 4
        %v837 = vsel %vm612, %v836, %v819
        %v838 = vrot.slane %v819, 4
        %v839 = vsel %vm612, %v831, %v838
        %v840 = vrot.slane %v835, 4
        %v841 = vsel %vm612, %v840, %v823
        %v842 = vrot.slane %v823, 4
        %v843 = vsel %vm612, %v835, %v842
        %845 = vrot.lane.b32.xlu0 %v590, 120
        %v846 = vpop.permute.xlu0 %845
        %848 = vrot.lane.b32.xlu0 %v590, 112
        %v849 = vpop.permute.xlu0 %848
        %851 = vrot.lane.b32.xlu0 %v590, 104
        %v852 = vpop.permute.xlu0 %851
        %v854 = vrot.slane %v849, 4
        %v855 = vsel %vm612, %v854, %v590
        %v856 = vrot.slane %v590, 4
        %v857 = vsel %vm612, %v849, %v856
        %v859 = vunpack.c.l.s4 1983009808
        %v860 = vunpack.c.0.s8 %v859
        %v861 = vperm.slane %v855, %v860
        %v863 = vunpack.c.l.s4 1983009808
        %v864 = vunpack.c.0.s8 %v863
        %v865 = vperm.slane %v857, %v864
        %v866 = vrot.slane %v852, 4
        %v867 = vsel %vm612, %v866, %v846
        %v868 = vrot.slane %v846, 4
        %v869 = vsel %vm612, %v852, %v868
        %v871 = vunpack.c.l.s4 1983009808
        %v872 = vunpack.c.0.s8 %v871
        %v873 = vperm.slane %v867, %v872
        %v875 = vunpack.c.l.s4 1983009808
        %v876 = vunpack.c.0.s8 %v875
        %v877 = vperm.slane %v869, %v876
        %v878 = vrot.slane %v873, 4
        %v879 = vsel %vm612, %v878, %v861
        %v880 = vrot.slane %v861, 4
        %v881 = vsel %vm612, %v873, %v880
        %v883 = vunpack.c.l.s4 1934713408
        %v884 = vunpack.c.0.s8 %v883
        %v885 = vperm.slane %v879, %v884
        %v887 = vunpack.c.l.s4 1934713408
        %v888 = vunpack.c.0.s8 %v887
        %v889 = vperm.slane %v881, %v888
        %v890 = vrot.slane %v877, 4
        %v891 = vsel %vm612, %v890, %v865
        %v892 = vrot.slane %v865, 4
        %v893 = vsel %vm612, %v877, %v892
        %v895 = vunpack.c.l.s4 1934713408
        %v896 = vunpack.c.0.s8 %v895
        %v897 = vperm.slane %v891, %v896
        %v899 = vunpack.c.l.s4 1934713408
        %v900 = vunpack.c.0.s8 %v899
        %v901 = vperm.slane %v893, %v900
        %v902 = vrot.slane %v885, 4
        %v903 = vsel %vm612, 0.0, %v902
        %v904 = vrot.slane %v889, 4
        %v905 = vsel %vm612, 0.0, %v904
        %v906 = vrot.slane %v897, 4
        %v907 = vsel %vm612, 0.0, %v906
        %v908 = vrot.slane %v901, 4
        %v909 = vsel %vm612, 0.0, %v908
        %v910 = vsel %vm612, %v904, %v885
        %v912 = vunpack.c.l.s4 1983009808
        %v913 = vunpack.c.0.s8 %v912
        %v914 = vperm.slane %v910, %v913
        %v915 = vrot.slane %v905, 4
        %v916 = vsel %vm612, %v915, %v903
        %v918 = vunpack.c.l.s4 1983009808
        %v919 = vunpack.c.0.s8 %v918
        %v920 = vperm.slane %v916, %v919
        %v921 = vsel %vm612, %v908, %v897
        %v923 = vunpack.c.l.s4 1983009808
        %v924 = vunpack.c.0.s8 %v923
        %v925 = vperm.slane %v921, %v924
        %v926 = vrot.slane %v909, 4
        %v927 = vsel %vm612, %v926, %v907
        %v929 = vunpack.c.l.s4 1983009808
        %v930 = vunpack.c.0.s8 %v929
        %v931 = vperm.slane %v927, %v930
        %v932 = vrot.slane %v920, 4
        %v933 = vsel %vm612, %v932, %v914
        %v934 = vrot.slane %v914, 4
        %v935 = vsel %vm612, %v920, %v934
        %v937 = vunpack.c.l.s4 1934713408
        %v938 = vunpack.c.0.s8 %v937
        %v939 = vperm.slane %v933, %v938
        %v941 = vunpack.c.l.s4 1934713408
        %v942 = vunpack.c.0.s8 %v941
        %v943 = vperm.slane %v935, %v942
        %v944 = vrot.slane %v931, 4
        %v945 = vsel %vm612, %v944, %v925
        %v946 = vrot.slane %v925, 4
        %v947 = vsel %vm612, %v931, %v946
        %v949 = vunpack.c.l.s4 1934713408
        %v950 = vunpack.c.0.s8 %v949
        %v951 = vperm.slane %v945, %v950
        %v953 = vunpack.c.l.s4 1934713408
        %v954 = vunpack.c.0.s8 %v953
        %v955 = vperm.slane %v947, %v954
        %v956 = vrot.slane %v951, 4
        %v957 = vsel %vm612, %v956, %v939
        %v958 = vrot.slane %v939, 4
        %v959 = vsel %vm612, %v951, %v958
        %v960 = vrot.slane %v955, 4
        %v961 = vsel %vm612, %v960, %v943
        %v962 = vrot.slane %v943, 4
        %v963 = vsel %vm612, %v955, %v962
        %964 = vrot.lane.b32.xlu0 %v590, 96
        %v965 = vpop.permute.xlu0 %964
        %966 = vrot.lane.b32.xlu0 %v846, 96
        %v967 = vpop.permute.xlu0 %966
        %968 = vrot.lane.b32.xlu0 %v849, 96
        %v969 = vpop.permute.xlu0 %968
        %970 = vrot.lane.b32.xlu0 %v852, 96
        %v971 = vpop.permute.xlu0 %970
        %v976 = vrot.slane %v969, 4
        %v977 = vsel %vm612, %v976, %v965
        %v978 = vrot.slane %v965, 4
        %v979 = vsel %vm612, %v969, %v978
        %v981 = vunpack.c.l.s4 1983009808
        %v982 = vunpack.c.0.s8 %v981
        %v983 = vperm.slane %v977, %v982
        %v985 = vunpack.c.l.s4 1983009808
        %v986 = vunpack.c.0.s8 %v985
        %v987 = vperm.slane %v979, %v986
        %v988 = vrot.slane %v971, 4
        %v989 = vsel %vm612, %v988, %v967
        %v990 = vrot.slane %v967, 4
        %v991 = vsel %vm612, %v971, %v990
        %v993 = vunpack.c.l.s4 1983009808
        %v994 = vunpack.c.0.s8 %v993
        %v995 = vperm.slane %v989, %v994
        %v997 = vunpack.c.l.s4 1983009808
        %v998 = vunpack.c.0.s8 %v997
        %v999 = vperm.slane %v991, %v998
        %v1000 = vrot.slane %v995, 4
        %v1001 = vsel %vm612, %v1000, %v983
        %v1002 = vrot.slane %v983, 4
        %v1003 = vsel %vm612, %v995, %v1002
        %v1005 = vunpack.c.l.s4 1934713408
        %v1006 = vunpack.c.0.s8 %v1005
        %v1007 = vperm.slane %v1001, %v1006
        %v1009 = vunpack.c.l.s4 1934713408
        %v1010 = vunpack.c.0.s8 %v1009
        %v1011 = vperm.slane %v1003, %v1010
        %v1012 = vrot.slane %v999, 4
        %v1013 = vsel %vm612, %v1012, %v987
        %v1014 = vrot.slane %v987, 4
        %v1015 = vsel %vm612, %v999, %v1014
        %v1017 = vunpack.c.l.s4 1934713408
        %v1018 = vunpack.c.0.s8 %v1017
        %v1019 = vperm.slane %v1013, %v1018
        %v1021 = vunpack.c.l.s4 1934713408
        %v1022 = vunpack.c.0.s8 %v1021
        %v1023 = vperm.slane %v1015, %v1022
        %v1024 = vrot.slane %v1007, 4
        %v1025 = vsel %vm612, 0.0, %v1024
        %v1026 = vrot.slane %v1011, 4
        %v1027 = vsel %vm612, 0.0, %v1026
        %v1028 = vrot.slane %v1019, 4
        %v1029 = vsel %vm612, 0.0, %v1028
        %v1030 = vrot.slane %v1023, 4
        %v1031 = vsel %vm612, 0.0, %v1030
        %v1032 = vsel %vm612, %v1026, %v1007
        %v1034 = vunpack.c.l.s4 1983009808
        %v1035 = vunpack.c.0.s8 %v1034
        %v1036 = vperm.slane %v1032, %v1035
        %v1037 = vrot.slane %v1027, 4
        %v1038 = vsel %vm612, %v1037, %v1025
        %v1040 = vunpack.c.l.s4 1983009808
        %v1041 = vunpack.c.0.s8 %v1040
        %v1042 = vperm.slane %v1038, %v1041
        %v1043 = vsel %vm612, %v1030, %v1019
        %v1045 = vunpack.c.l.s4 1983009808
        %v1046 = vunpack.c.0.s8 %v1045
        %v1047 = vperm.slane %v1043, %v1046
        %v1048 = vrot.slane %v1031, 4
        %v1049 = vsel %vm612, %v1048, %v1029
        %v1051 = vunpack.c.l.s4 1983009808
        %v1052 = vunpack.c.0.s8 %v1051
        %v1053 = vperm.slane %v1049, %v1052
        %v1054 = vrot.slane %v1042, 4
        %v1055 = vsel %vm612, %v1054, %v1036
        %v1056 = vrot.slane %v1036, 4
        %v1057 = vsel %vm612, %v1042, %v1056
        %v1059 = vunpack.c.l.s4 1934713408
        %v1060 = vunpack.c.0.s8 %v1059
        %v1061 = vperm.slane %v1055, %v1060
        %v1063 = vunpack.c.l.s4 1934713408
        %v1064 = vunpack.c.0.s8 %v1063
        %v1065 = vperm.slane %v1057, %v1064
        %v1066 = vrot.slane %v1053, 4
        %v1067 = vsel %vm612, %v1066, %v1047
        %v1068 = vrot.slane %v1047, 4
        %v1069 = vsel %vm612, %v1053, %v1068
        %v1071 = vunpack.c.l.s4 1934713408
        %v1072 = vunpack.c.0.s8 %v1071
        %v1073 = vperm.slane %v1067, %v1072
        %v1075 = vunpack.c.l.s4 1934713408
        %v1076 = vunpack.c.0.s8 %v1075
        %v1077 = vperm.slane %v1069, %v1076
        %v1078 = vrot.slane %v1073, 4
        %v1079 = vsel %vm612, %v1078, %v1061
        %v1080 = vrot.slane %v1061, 4
        %v1081 = vsel %vm612, %v1073, %v1080
        %v1082 = vrot.slane %v1077, 4
        %v1083 = vsel %vm612, %v1082, %v1065
        %v1084 = vrot.slane %v1065, 4
        %v1085 = vsel %vm612, %v1077, %v1084
        %1086 = vrot.lane.b32.xlu0 %v590, 64
        %v1087 = vpop.permute.xlu0 %1086
        %1088 = vrot.lane.b32.xlu0 %v846, 64
        %v1089 = vpop.permute.xlu0 %1088
        %1090 = vrot.lane.b32.xlu0 %v849, 64
        %v1091 = vpop.permute.xlu0 %1090
        %1092 = vrot.lane.b32.xlu0 %v852, 64
        %v1093 = vpop.permute.xlu0 %1092
        %v1098 = vrot.slane %v1091, 4
        %v1099 = vsel %vm612, %v1098, %v1087
        %v1100 = vrot.slane %v1087, 4
        %v1101 = vsel %vm612, %v1091, %v1100
        %v1103 = vunpack.c.l.s4 1983009808
        %v1104 = vunpack.c.0.s8 %v1103
        %v1105 = vperm.slane %v1099, %v1104
        %v1107 = vunpack.c.l.s4 1983009808
        %v1108 = vunpack.c.0.s8 %v1107
        %v1109 = vperm.slane %v1101, %v1108
        %v1110 = vrot.slane %v1093, 4
        %v1111 = vsel %vm612, %v1110, %v1089
        %v1112 = vrot.slane %v1089, 4
        %v1113 = vsel %vm612, %v1093, %v1112
        %v1115 = vunpack.c.l.s4 1983009808
        %v1116 = vunpack.c.0.s8 %v1115
        %v1117 = vperm.slane %v1111, %v1116
        %v1119 = vunpack.c.l.s4 1983009808
        %v1120 = vunpack.c.0.s8 %v1119
        %v1121 = vperm.slane %v1113, %v1120
        %v1122 = vrot.slane %v1117, 4
        %v1123 = vsel %vm612, %v1122, %v1105
        %v1124 = vrot.slane %v1105, 4
        %v1125 = vsel %vm612, %v1117, %v1124
        %v1127 = vunpack.c.l.s4 1934713408
        %v1128 = vunpack.c.0.s8 %v1127
        %v1129 = vperm.slane %v1123, %v1128
        %v1131 = vunpack.c.l.s4 1934713408
        %v1132 = vunpack.c.0.s8 %v1131
        %v1133 = vperm.slane %v1125, %v1132
        %v1134 = vrot.slane %v1121, 4
        %v1135 = vsel %vm612, %v1134, %v1109
        %v1136 = vrot.slane %v1109, 4
        %v1137 = vsel %vm612, %v1121, %v1136
        %v1139 = vunpack.c.l.s4 1934713408
        %v1140 = vunpack.c.0.s8 %v1139
        %v1141 = vperm.slane %v1135, %v1140
        %v1143 = vunpack.c.l.s4 1934713408
        %v1144 = vunpack.c.0.s8 %v1143
        %v1145 = vperm.slane %v1137, %v1144
        %v1146 = vrot.slane %v1129, 4
        %v1147 = vsel %vm612, 0.0, %v1146
        %v1148 = vrot.slane %v1133, 4
        %v1149 = vsel %vm612, 0.0, %v1148
        %v1150 = vrot.slane %v1141, 4
        %v1151 = vsel %vm612, 0.0, %v1150
        %v1152 = vrot.slane %v1145, 4
        %v1153 = vsel %vm612, 0.0, %v1152
        %v1154 = vsel %vm612, %v1148, %v1129
        %v1156 = vunpack.c.l.s4 1983009808
        %v1157 = vunpack.c.0.s8 %v1156
        %v1158 = vperm.slane %v1154, %v1157
        %v1159 = vrot.slane %v1149, 4
        %v1160 = vsel %vm612, %v1159, %v1147
        %v1162 = vunpack.c.l.s4 1983009808
        %v1163 = vunpack.c.0.s8 %v1162
        %v1164 = vperm.slane %v1160, %v1163
        %v1165 = vsel %vm612, %v1152, %v1141
        %v1167 = vunpack.c.l.s4 1983009808
        %v1168 = vunpack.c.0.s8 %v1167
        %v1169 = vperm.slane %v1165, %v1168
        %v1170 = vrot.slane %v1153, 4
        %v1171 = vsel %vm612, %v1170, %v1151
        %v1173 = vunpack.c.l.s4 1983009808
        %v1174 = vunpack.c.0.s8 %v1173
        %v1175 = vperm.slane %v1171, %v1174
        %v1176 = vrot.slane %v1164, 4
        %v1177 = vsel %vm612, %v1176, %v1158
        %v1178 = vrot.slane %v1158, 4
        %v1179 = vsel %vm612, %v1164, %v1178
        %v1181 = vunpack.c.l.s4 1934713408
        %v1182 = vunpack.c.0.s8 %v1181
        %v1183 = vperm.slane %v1177, %v1182
        %v1185 = vunpack.c.l.s4 1934713408
        %v1186 = vunpack.c.0.s8 %v1185
        %v1187 = vperm.slane %v1179, %v1186
        %v1188 = vrot.slane %v1175, 4
        %v1189 = vsel %vm612, %v1188, %v1169
        %v1190 = vrot.slane %v1169, 4
        %v1191 = vsel %vm612, %v1175, %v1190
        %v1193 = vunpack.c.l.s4 1934713408
        %v1194 = vunpack.c.0.s8 %v1193
        %v1195 = vperm.slane %v1189, %v1194
        %v1197 = vunpack.c.l.s4 1934713408
        %v1198 = vunpack.c.0.s8 %v1197
        %v1199 = vperm.slane %v1191, %v1198
        %v1200 = vrot.slane %v1195, 4
        %v1201 = vsel %vm612, %v1200, %v1183
        %v1202 = vrot.slane %v1183, 4
        %v1203 = vsel %vm612, %v1195, %v1202
        %v1204 = vrot.slane %v1199, 4
        %v1205 = vsel %vm612, %v1204, %v1187
        %v1206 = vrot.slane %v1187, 4
        %v1207 = vsel %vm612, %v1199, %v1206
        %v1208 = vlaneseq
        %v1209 = vshrl.u32 %v1208, 7
        %v1210 = vlaneseq
        %v1211 = vand.u32 %v1210, 127
        %vm1212 = vcmp.ge.s32.totalorder %v1209, %v1211
        %v1213 = vpack.c.bf16 %v957, %v957
        %v1214 = vpack.c.bf16 %v959, %v959
        %v1215 = vpack.c.bf16 %v961, %v961
        %v1216 = vpack.c.bf16 %v963, %v963
        %v1217 = vpack.c.bf16 %v715, %v715
        %v1218 = vpack.c.bf16 %v717, %v717
        %v1219 = vpack.c.bf16 %v719, %v719
        %v1220 = vpack.c.bf16 %v721, %v721
        %vm1221 = vcmask 64512
        %v1223 = vsel %vm1221, %v1213, 0
        %v1226 = vsel %vm1221, %v1217, 0
        %1228 = vmatpush.bf16.xpose.msra.mxu0 0
        %1229 = vmatpush.bf16.xpose.msra.mxu0 0
        %1230 = vmatpush.bf16.xpose.msra.mxu0 0
        %1231 = vmatpush.bf16.xpose.msra.mxu0 0
        %1232 = vmatpush.bf16.xpose.msra.mxu0 0
        %1233 = vmatpush.bf16.xpose.msra.mxu0 0
        %1234 = vmatpush.bf16.xpose.msra.mxu0 0
        %1235 = vmatpush.bf16.xpose.msra.mxu0 %v1226
        %1236 = vmatmul.bf16.gmra.mxu0 %v1223
        %v1237 = vpop.f32.mrf.mxu0
        %v1238 = vadd.f32 0.0, %v1237
        %v1239 = vpop.f32.mrf.mxu0
        %1240 = vdwg.mxu0
        %v1242 = vsel %vm1221, %v1214, 0
        %v1245 = vsel %vm1221, %v1218, 0
        %1247 = vmatpush.bf16.xpose.msra.mxu0 0
        %1248 = vmatpush.bf16.xpose.msra.mxu0 0
        %1249 = vmatpush.bf16.xpose.msra.mxu0 0
        %1250 = vmatpush.bf16.xpose.msra.mxu0 0
        %1251 = vmatpush.bf16.xpose.msra.mxu0 0
        %1252 = vmatpush.bf16.xpose.msra.mxu0 0
        %1253 = vmatpush.bf16.xpose.msra.mxu0 0
        %1254 = vmatpush.bf16.xpose.msra.mxu0 %v1245
        %1255 = vmatmul.bf16.gmra.mxu0 %v1242
        %v1256 = vpop.f32.mrf.mxu0
        %v1257 = vadd.f32 0.0, %v1256
        %v1258 = vpop.f32.mrf.mxu0
        %1259 = vdwg.mxu0
        %v1261 = vsel %vm1221, %v1215, 0
        %v1264 = vsel %vm1221, %v1219, 0
        %1266 = vmatpush.bf16.xpose.msra.mxu0 0
        %1267 = vmatpush.bf16.xpose.msra.mxu0 0
        %1268 = vmatpush.bf16.xpose.msra.mxu0 0
        %1269 = vmatpush.bf16.xpose.msra.mxu0 0
        %1270 = vmatpush.bf16.xpose.msra.mxu0 0
        %1271 = vmatpush.bf16.xpose.msra.mxu0 0
        %1272 = vmatpush.bf16.xpose.msra.mxu0 0
        %1273 = vmatpush.bf16.xpose.msra.mxu0 %v1264
        %1274 = vmatmul.bf16.gmra.mxu0 %v1261
        %v1275 = vpop.f32.mrf.mxu0
        %v1276 = vadd.f32 0.0, %v1275
        %v1277 = vpop.f32.mrf.mxu0
        %1278 = vdwg.mxu0
        %v1280 = vsel %vm1221, %v1216, 0
        %v1283 = vsel %vm1221, %v1220, 0
        %1285 = vmatpush.bf16.xpose.msra.mxu0 0
        %1286 = vmatpush.bf16.xpose.msra.mxu0 0
        %1287 = vmatpush.bf16.xpose.msra.mxu0 0
        %1288 = vmatpush.bf16.xpose.msra.mxu0 0
        %1289 = vmatpush.bf16.xpose.msra.mxu0 0
        %1290 = vmatpush.bf16.xpose.msra.mxu0 0
        %1291 = vmatpush.bf16.xpose.msra.mxu0 0
        %1292 = vmatpush.bf16.xpose.msra.mxu0 %v1283
        %1293 = vmatmul.bf16.gmra.mxu0 %v1280
        %v1294 = vpop.f32.mrf.mxu0
        %v1295 = vadd.f32 0.0, %v1294
        %v1296 = vpop.f32.mrf.mxu0
        %1297 = vdwg.mxu0
        %v1298 = vsel %vm1212, 1, 0
        %vm1299 = vcmp.eq.s32.totalorder %v1298, 1
        %v1300 = vsel %vm1299, %v1238, -1e+10
        %v1301 = vsel %vm1299, %v1257, -1e+10
        %v1302 = vsel %vm1299, %v1276, -1e+10
        %v1303 = vsel %vm1299, %v1295, -1e+10
        %v1304 = vmul.f32 %v957, %v1079
        %v1305 = vmul.f32 %v959, %v1081
        %v1306 = vmul.f32 %v961, %v1083
        %v1307 = vmul.f32 %v963, %v1085
        %v1308 = vsel %vm1221, %v1304, 0.0
        %1309 = vadd.xlane.f32.xlu0 %v1308
        %v1310 = vpop.xlane.xlu0 %1309
        %v1311 = vsel %vm1221, %v1305, 0.0
        %1312 = vadd.xlane.f32.xlu0 %v1311
        %v1313 = vpop.xlane.xlu0 %1312
        %v1314 = vsel %vm1221, %v1306, 0.0
        %1315 = vadd.xlane.f32.xlu0 %v1314
        %v1316 = vpop.xlane.xlu0 %1315
        %v1317 = vsel %vm1221, %v1307, 0.0
        %1318 = vadd.xlane.f32.xlu0 %v1317
        %v1319 = vpop.xlane.xlu0 %1318
        %v1320 = vsel %vm1221, %v1300, -inf
        %1321 = vmax.xlane.f32.xlu0 %v1320
        %v1322 = vpop.xlane.xlu0 %1321
        %v1323 = vsel %vm1221, %v1301, -inf
        %1324 = vmax.xlane.f32.xlu0 %v1323
        %v1325 = vpop.xlane.xlu0 %1324
        %v1326 = vsel %vm1221, %v1302, -inf
        %1327 = vmax.xlane.f32.xlu0 %v1326
        %v1328 = vpop.xlane.xlu0 %1327
        %v1329 = vsel %vm1221, %v1303, -inf
        %1330 = vmax.xlane.f32.xlu0 %v1329
        %v1331 = vpop.xlane.xlu0 %1330
        %v1332 = vmax.f32 %v1322, %v1310
        %v1333 = vmax.f32 %v1325, %v1313
        %v1334 = vmax.f32 %v1328, %v1316
        %v1335 = vmax.f32 %v1331, %v1319
        %v1336 = vsub.f32 %v1300, %v1332
        %v1337 = vsub.f32 %v1301, %v1333
        %v1338 = vsub.f32 %v1302, %v1334
        %v1339 = vsub.f32 %v1303, %v1335
        %v1340 = vmul.f32 %v1336, 1.442695
        %v1341 = vpow.pop %v1340
        %v1342 = vmul.f32 %v1337, 1.442695
        %v1343 = vpow.pop %v1342
        %v1344 = vmul.f32 %v1338, 1.442695
        %v1345 = vpow.pop %v1344
        %v1346 = vmul.f32 %v1339, 1.442695
        %v1347 = vpow.pop %v1346
        %v1348 = vsub.f32 %v1310, %v1332
        %v1349 = vsub.f32 %v1313, %v1333
        %v1350 = vsub.f32 %v1316, %v1334
        %v1351 = vsub.f32 %v1319, %v1335
        %v1352 = vmul.f32 %v1348, 1.442695
        %v1353 = vpow.pop %v1352
        %v1354 = vmul.f32 %v1349, 1.442695
        %v1355 = vpow.pop %v1354
        %v1356 = vmul.f32 %v1350, 1.442695
        %v1357 = vpow.pop %v1356
        %v1358 = vmul.f32 %v1351, 1.442695
        %v1359 = vpow.pop %v1358
        %v1360 = vsel %vm1221, %v1341, 0.0
        %1361 = vadd.xlane.f32.xlu0 %v1360
        %v1362 = vpop.xlane.xlu0 %1361
        %v1363 = vsel %vm1221, %v1343, 0.0
        %1364 = vadd.xlane.f32.xlu0 %v1363
        %v1365 = vpop.xlane.xlu0 %1364
        %v1366 = vsel %vm1221, %v1345, 0.0
        %1367 = vadd.xlane.f32.xlu0 %v1366
        %v1368 = vpop.xlane.xlu0 %1367
        %v1369 = vsel %vm1221, %v1347, 0.0
        %1370 = vadd.xlane.f32.xlu0 %v1369
        %v1371 = vpop.xlane.xlu0 %1370
        %v1372 = vadd.f32 %v1362, %v1353
        %v1373 = vadd.f32 %v1365, %v1355
        %v1374 = vadd.f32 %v1368, %v1357
        %v1375 = vadd.f32 %v1371, %v1359
        %v1376 = vrcp.pop %v1372
        %v1377 = vrcp.pop %v1373
        %v1378 = vrcp.pop %v1374
        %v1379 = vrcp.pop %v1375
        %v1380 = vmul.f32 %v1341, %v1376
        %v1381 = vmul.f32 %v1343, %v1377
        %v1382 = vmul.f32 %v1345, %v1378
        %v1383 = vmul.f32 %v1347, %v1379
        %v1384 = vmul.f32 %v1353, %v1376
        %v1385 = vmul.f32 %v1355, %v1377
        %v1386 = vmul.f32 %v1357, %v1378
        %v1387 = vmul.f32 %v1359, %v1379
        %v1388 = vpack.c.bf16 %v1380, %v1380
        %v1389 = vpack.c.bf16 %v1381, %v1381
        %v1390 = vpack.c.bf16 %v1382, %v1382
        %v1391 = vpack.c.bf16 %v1383, %v1383
        %v1392 = vpack.c.bf16 %v837, %v837
        %v1393 = vpack.c.bf16 %v839, %v839
        %v1394 = vpack.c.bf16 %v841, %v841
        %v1395 = vpack.c.bf16 %v843, %v843
        %v1396 = vmul.f32 %v1384, %v1201
        %v1397 = vmul.f32 %v1385, %v1203
        %v1398 = vmul.f32 %v1386, %v1205
        %v1399 = vmul.f32 %v1387, %v1207
        %v1401 = vsel %vm1221, %v1388, 0
        %vm1403 = vcmask 1043456
        %v1405 = vsel %vm1403, %v1392, 0
        %1407 = vmatpush.bf16.msra.mxu0 0
        %1408 = vmatpush.bf16.msra.mxu0 0
        %1409 = vmatpush.bf16.msra.mxu0 0
        %1410 = vmatpush.bf16.msra.mxu0 0
        %1411 = vmatpush.bf16.msra.mxu0 0
        %1412 = vmatpush.bf16.msra.mxu0 0
        %1413 = vmatpush.bf16.msra.mxu0 0
        %1414 = vmatpush.bf16.msra.mxu0 %v1405
        %1415 = vmatmul.bf16.gmra.mxu0 %v1401
        %v1416 = vpop.f32.mrf.mxu0
        %v1417 = vadd.f32 %v1396, %v1416
        %v1418 = vpop.f32.mrf.mxu0
        %1419 = vdwg.mxu0
        %v1421 = vsel %vm1221, %v1389, 0
        %v1424 = vsel %vm1403, %v1393, 0
        %1426 = vmatpush.bf16.msra.mxu0 0
        %1427 = vmatpush.bf16.msra.mxu0 0
        %1428 = vmatpush.bf16.msra.mxu0 0
        %1429 = vmatpush.bf16.msra.mxu0 0
        %1430 = vmatpush.bf16.msra.mxu0 0
        %1431 = vmatpush.bf16.msra.mxu0 0
        %1432 = vmatpush.bf16.msra.mxu0 0
        %1433 = vmatpush.bf16.msra.mxu0 %v1424
        %1434 = vmatmul.bf16.gmra.mxu0 %v1421
        %v1435 = vpop.f32.mrf.mxu0
        %v1436 = vadd.f32 %v1397, %v1435
        %v1437 = vpop.f32.mrf.mxu0
        %1438 = vdwg.mxu0
        %v1440 = vsel %vm1221, %v1390, 0
        %v1443 = vsel %vm1403, %v1394, 0
        %1445 = vmatpush.bf16.msra.mxu0 0
        %1446 = vmatpush.bf16.msra.mxu0 0
        %1447 = vmatpush.bf16.msra.mxu0 0
        %1448 = vmatpush.bf16.msra.mxu0 0
        %1449 = vmatpush.bf16.msra.mxu0 0
        %1450 = vmatpush.bf16.msra.mxu0 0
        %1451 = vmatpush.bf16.msra.mxu0 0
        %1452 = vmatpush.bf16.msra.mxu0 %v1443
        %1453 = vmatmul.bf16.gmra.mxu0 %v1440
        %v1454 = vpop.f32.mrf.mxu0
        %v1455 = vadd.f32 %v1398, %v1454
        %v1456 = vpop.f32.mrf.mxu0
        %1457 = vdwg.mxu0
        %v1459 = vsel %vm1221, %v1391, 0
        %v1462 = vsel %vm1403, %v1395, 0
        %1464 = vmatpush.bf16.msra.mxu0 0
        %1465 = vmatpush.bf16.msra.mxu0 0
        %1466 = vmatpush.bf16.msra.mxu0 0
        %1467 = vmatpush.bf16.msra.mxu0 0
        %1468 = vmatpush.bf16.msra.mxu0 0
        %1469 = vmatpush.bf16.msra.mxu0 0
        %1470 = vmatpush.bf16.msra.mxu0 0
        %1471 = vmatpush.bf16.msra.mxu0 %v1462
        %1472 = vmatmul.bf16.gmra.mxu0 %v1459
        %v1473 = vpop.f32.mrf.mxu0
        %v1474 = vadd.f32 %v1399, %v1473
        %v1475 = vpop.f32.mrf.mxu0
        %1476 = vdwg.mxu0
        %v1477 = vrot.slane %v1455, 4
        %v1478 = vsel %vm612, %v1477, %v1417
        %v1479 = vrot.slane %v1417, 4
        %v1480 = vsel %vm612, %v1455, %v1479
        %v1482 = vunpack.c.l.s4 1983009808
        %v1483 = vunpack.c.0.s8 %v1482
        %v1484 = vperm.slane %v1478, %v1483
        %v1486 = vunpack.c.l.s4 1983009808
        %v1487 = vunpack.c.0.s8 %v1486
        %v1488 = vperm.slane %v1480, %v1487
        %v1489 = vrot.slane %v1474, 4
        %v1490 = vsel %vm612, %v1489, %v1436
        %v1491 = vrot.slane %v1436, 4
        %v1492 = vsel %vm612, %v1474, %v1491
        %v1494 = vunpack.c.l.s4 1983009808
        %v1495 = vunpack.c.0.s8 %v1494
        %v1496 = vperm.slane %v1490, %v1495
        %v1498 = vunpack.c.l.s4 1983009808
        %v1499 = vunpack.c.0.s8 %v1498
        %v1500 = vperm.slane %v1492, %v1499
        %v1501 = vrot.slane %v1496, 4
        %v1502 = vsel %vm612, %v1501, %v1484
        %v1503 = vrot.slane %v1484, 4
        %v1504 = vsel %vm612, %v1496, %v1503
        %v1506 = vunpack.c.l.s4 1934713408
        %v1507 = vunpack.c.0.s8 %v1506
        %v1508 = vperm.slane %v1502, %v1507
        %v1510 = vunpack.c.l.s4 1934713408
        %v1511 = vunpack.c.0.s8 %v1510
        %v1512 = vperm.slane %v1504, %v1511
        %v1513 = vrot.slane %v1500, 4
        %v1514 = vsel %vm612, %v1513, %v1488
        %v1515 = vrot.slane %v1488, 4
        %v1516 = vsel %vm612, %v1500, %v1515
        %v1518 = vunpack.c.l.s4 1934713408
        %v1519 = vunpack.c.0.s8 %v1518
        %v1520 = vperm.slane %v1514, %v1519
        %v1522 = vunpack.c.l.s4 1934713408
        %v1523 = vunpack.c.0.s8 %v1522
        %v1524 = vperm.slane %v1516, %v1523
        %v1525 = vrot.slane %v1508, 4
        %v1526 = vsel %vm612, 0.0, %v1525
        %v1527 = vrot.slane %v1512, 4
        %v1528 = vsel %vm612, 0.0, %v1527
        %v1529 = vrot.slane %v1520, 4
        %v1530 = vsel %vm612, 0.0, %v1529
        %v1531 = vrot.slane %v1524, 4
        %v1532 = vsel %vm612, 0.0, %v1531
        %v1533 = vsel %vm612, %v1527, %v1508
        %v1535 = vunpack.c.l.s4 1983009808
        %v1536 = vunpack.c.0.s8 %v1535
        %v1537 = vperm.slane %v1533, %v1536
        %v1538 = vrot.slane %v1528, 4
        %v1539 = vsel %vm612, %v1538, %v1526
        %v1541 = vunpack.c.l.s4 1983009808
        %v1542 = vunpack.c.0.s8 %v1541
        %v1543 = vperm.slane %v1539, %v1542
        %v1544 = vsel %vm612, %v1531, %v1520
        %v1546 = vunpack.c.l.s4 1983009808
        %v1547 = vunpack.c.0.s8 %v1546
        %v1548 = vperm.slane %v1544, %v1547
        %v1549 = vrot.slane %v1532, 4
        %v1550 = vsel %vm612, %v1549, %v1530
        %v1552 = vunpack.c.l.s4 1983009808
        %v1553 = vunpack.c.0.s8 %v1552
        %v1554 = vperm.slane %v1550, %v1553
        %v1555 = vrot.slane %v1543, 4
        %v1556 = vsel %vm612, %v1555, %v1537
        %v1557 = vrot.slane %v1537, 4
        %v1558 = vsel %vm612, %v1543, %v1557
        %v1560 = vunpack.c.l.s4 1934713408
        %v1561 = vunpack.c.0.s8 %v1560
        %v1562 = vperm.slane %v1556, %v1561
        %v1564 = vunpack.c.l.s4 1934713408
        %v1565 = vunpack.c.0.s8 %v1564
        %v1566 = vperm.slane %v1558, %v1565
        %v1567 = vrot.slane %v1554, 4
        %v1568 = vsel %vm612, %v1567, %v1548
        %v1569 = vrot.slane %v1548, 4
        %v1570 = vsel %vm612, %v1554, %v1569
        %v1572 = vunpack.c.l.s4 1934713408
        %v1573 = vunpack.c.0.s8 %v1572
        %v1574 = vperm.slane %v1568, %v1573
        %v1576 = vunpack.c.l.s4 1934713408
        %v1577 = vunpack.c.0.s8 %v1576
        %v1578 = vperm.slane %v1570, %v1577
        %v1579 = vrot.slane %v1574, 4
        %v1580 = vsel %vm612, %v1579, %v1562
        %v1581 = vrot.slane %v1562, 4
        %v1582 = vsel %vm612, %v1574, %v1581
        %v1583 = vrot.slane %v1578, 4
        %v1584 = vsel %vm612, %v1583, %v1566
        %v1585 = vrot.slane %v1566, 4
        %v1586 = vsel %vm612, %v1578, %v1585
        %1588 = vrot.lane.b32.xlu0 %v1582, 8
        %v1589 = vpop.permute.xlu0 %1588
        %1592 = vrot.lane.b32.xlu0 %v1584, 16
        %v1593 = vpop.permute.xlu0 %1592
        %1596 = vrot.lane.b32.xlu0 %v1586, 24
        %v1597 = vpop.permute.xlu0 %1596
        %v1599 = vsel %vm1221, %v1580, %v1589
        %vm1600 = vcmask 130048
        %v1601 = vsel %vm1600, %v1599, %v1593
        %vm1602 = vcmask 195584
        %v1603 = vsel %vm1602, %v1601, %v1597
        %vm1604 = vcmp.eq.s32.totalorder %v1209, %v1211
        %v1605 = vsel %vm1604, 1, 0
        %vm1606 = vcmp.eq.s32.totalorder %v1605, 1
        %v1607 = vsel %vm1606, %v1384, 0.0
        %v1608 = vsel %vm1606, %v1385, 0.0
        %v1609 = vsel %vm1606, %v1386, 0.0
        %v1610 = vsel %vm1606, %v1387, 0.0
        %1615 = vrot.lane.b32.xlu0 %v1607, 8
        %v1616 = vpop.permute.xlu0 %1615
        %1617 = vrot.lane.b32.xlu0 %v1608, 8
        %v1618 = vpop.permute.xlu0 %1617
        %1619 = vrot.lane.b32.xlu0 %v1609, 8
        %v1620 = vpop.permute.xlu0 %1619
        %1621 = vrot.lane.b32.xlu0 %v1610, 8
        %v1622 = vpop.permute.xlu0 %1621
        %v1627 = vsel %vm1221, %v1380, %v1616
        %v1628 = vsel %vm1221, %v1381, %v1618
        %v1629 = vsel %vm1221, %v1382, %v1620
        %v1630 = vsel %vm1221, %v1383, %v1622
        %v1631 = vpack.c.bf16 %v1627, %v1627
        %v1632 = vpack.c.bf16 %v1628, %v1628
        %v1633 = vpack.c.bf16 %v1629, %v1629
        %v1634 = vpack.c.bf16 %v1630, %v1630
        %vm1635 = vcmask 125952
        %1636 = vst.msk [vmem:[%s471] sm:$0xf] %vm1635, %v1631
        %1637 = vst.msk [vmem:[%s471 + $0x4] sm:$0xf] %vm1635, %v1632
        %1638 = vst.msk [vmem:[%s471 + $0x8] sm:$0xf] %vm1635, %v1633
        %1639 = vst.msk [vmem:[%s471 + $0xc] sm:$0xf] %vm1635, %v1634
        %v1640 = vpack.c.bf16 %v1603, %v1603
        %v1641 = vld [vmem:[%s5] sm:$0xf]
        %v1642 = vld [vmem:[%s5 + $0x4] sm:$0xf]
        %v1643 = vld [vmem:[%s5 + $0x8] sm:$0xf]
        %v1644 = vld [vmem:[%s5 + $0xc] sm:$0xf]
        %v1645 = vld [vmem:[%s6] sm:$0x1]
        %v1647 = vperm.slane %v1645, 0
        %v1653 = vunpack.c.l.b16 %v1641
        %v1654 = vunpack.c.l.b16 %v1642
        %v1655 = vunpack.c.l.b16 %v1643
        %v1656 = vunpack.c.l.b16 %v1644
        %v1657 = vpack.c.b16 %v1654, %v1653
        %v1658 = vpack.c.b16 %v1656, %v1655
        %v1662 = vsel %vm482, %v1640, 0
        %1664 = vmatpush.bf16.msra.mxu0 0
        %1665 = vmatpush.bf16.msra.mxu0 0
        %1666 = vmatpush.bf16.msra.mxu0 0
        %1667 = vmatpush.bf16.msra.mxu0 0
        %1668 = vmatpush.bf16.msra.mxu0 0
        %1669 = vmatpush.bf16.msra.mxu0 0
        %1670 = vmatpush.bf16.msra.mxu0 %v1658
        %1671 = vmatpush.bf16.msra.mxu0 %v1657
        %1672 = vmatmul.bf16.gmra.mxu0 %v1662
        %v1673 = vpop.f32.mrf.mxu0
        %v1674 = vadd.f32 %v1647, %v1673
        %v1675 = vpop.f32.mrf.mxu0
        %1676 = vdwg.mxu0
        %v1677 = vadd.f32 %v553, %v1674
        %v1678 = vld [vmem:[%s7] sm:$0x1]
        %v1679 = vld [vmem:[%s8] sm:$0x1]
        %v1680 = vsel %vm482, %v1677, 0.0
        %1681 = vadd.xlane.f32.xlu0 %v1680
        %v1682 = vpop.xlane.xlu0 %1681
        %v1683 = vmul.f32 %v1682, %v495
        %v1684 = vsub.f32 %v1677, %v1683
        %v1685 = vmul.f32 %v1684, %v1684
        %v1686 = vsel %vm482, %v1685, 0.0
        %1687 = vadd.xlane.f32.xlu0 %v1686
        %v1688 = vpop.xlane.xlu0 %1687
        %v1689 = vmul.f32 %v1688, %v495
        %v1690 = vadd.f32 %v1689, 1e-12
        %v1691 = vrsqrt.pop %v1690
        %v1692 = vmul.f32 %v1691, %v1690
        %v1693 = vmul.f32 %v1692, %v1691
        %v1694 = vmul.f32 0.5, %v1693
        %v1695 = vsub.f32 1.5, %v1694
        %v1696 = vmul.f32 %v1691, %v1695
        %vm1697 = vweird.f32 %v1690
        %vm1698 = vweird.f32 %v1691
        %vm1699 = vmor %vm1697, %vm1698
        %v1700 = vsel %vm1699, %v1691, %v1696
        %v1701 = vmul.f32 %v1684, %v1700
        %v1703 = vperm.slane %v1678, 0
        %v1705 = vmul.f32 %v1703, %v1701
        %v1707 = vperm.slane %v1679, 0
        %v1709 = vadd.f32 %v1705, %v1707
        %v1710 = vpack.c.bf16 %v1709, %v1709
        %v1711 = vld [vmem:[%s9] sm:$0xf]
        %v1712 = vld [vmem:[%s9 + $0x4] sm:$0xf]
        %v1713 = vld [vmem:[%s9 + $0x8] sm:$0xf]
        %v1714 = vld [vmem:[%s9 + $0xc] sm:$0xf]
        %v1715 = vld [vmem:[%s10] sm:$0x1]
        %v1717 = vperm.slane %v1715, 0
        %v1723 = vunpack.c.l.b16 %v1711
        %v1724 = vunpack.c.l.b16 %v1712
        %v1725 = vunpack.c.l.b16 %v1713
        %v1726 = vunpack.c.l.b16 %v1714
        %v1727 = vpack.c.b16 %v1724, %v1723
        %v1728 = vpack.c.b16 %v1726, %v1725
        %v1732 = vsel %vm482, %v1710, 0
        %1734 = vmatpush.bf16.msra.mxu0 0
        %1735 = vmatpush.bf16.msra.mxu0 0
        %1736 = vmatpush.bf16.msra.mxu0 0
        %1737 = vmatpush.bf16.msra.mxu0 0
        %1738 = vmatpush.bf16.msra.mxu0 0
        %1739 = vmatpush.bf16.msra.mxu0 0
        %1740 = vmatpush.bf16.msra.mxu0 %v1728
        %1741 = vmatpush.bf16.msra.mxu0 %v1727
        %1742 = vmatmul.bf16.gmra.mxu0 %v1732
        %v1743 = vpop.f32.mrf.mxu0
        %v1744 = vadd.f32 %v1717, %v1743
        %v1745 = vpop.f32.mrf.mxu0
        %1746 = vdwg.mxu0
        %v1747 = vmul.f32 %v1744, 0.5
        %v1748 = vmul.f32 %v1744, %v1744
        %v1749 = vmul.f32 %v1744, %v1748
        %v1750 = vmul.f32 %v1749, 0.044715
        %v1751 = vadd.f32 %v1744, %v1750
        %v1752 = vmul.f32 %v1751, 0.7978846
        %v1753 = vtanh.pop %v1752
        %v1754 = vadd.f32 %v1753, 1.0
        %v1755 = vmul.f32 %v1747, %v1754
        %v1756 = vpack.c.bf16 %v1755, %v1755
        %v1757 = vld [vmem:[%s11] sm:$0xf]
        %v1758 = vld [vmem:[%s11 + $0x4] sm:$0xf]
        %v1759 = vld [vmem:[%s11 + $0x8] sm:$0xf]
        %v1760 = vld [vmem:[%s11 + $0xc] sm:$0xf]
        %v1761 = vld [vmem:[%s11 + $0x10] sm:$0xf]
        %v1762 = vld [vmem:[%s11 + $0x14] sm:$0xf]
        %v1763 = vld [vmem:[%s11 + $0x18] sm:$0xf]
        %v1764 = vld [vmem:[%s11 + $0x1c] sm:$0xf]
        %v1765 = vld [vmem:[%s11 + $0x20] sm:$0xf]
        %v1766 = vld [vmem:[%s11 + $0x24] sm:$0xf]
        %v1767 = vld [vmem:[%s11 + $0x28] sm:$0xf]
        %v1768 = vld [vmem:[%s11 + $0x2c] sm:$0xf]
        %v1769 = vld [vmem:[%s11 + $0x30] sm:$0xf]
        %v1770 = vld [vmem:[%s11 + $0x34] sm:$0xf]
        %v1771 = vld [vmem:[%s11 + $0x38] sm:$0xf]
        %v1772 = vld [vmem:[%s11 + $0x3c] sm:$0xf]
        %v1773 = vld [vmem:[%s12] sm:$0x1]
        %v1775 = vperm.slane %v1773, 0
        %v1793 = vunpack.c.l.b16 %v1757
        %v1794 = vunpack.c.l.b16 %v1758
        %v1795 = vunpack.c.l.b16 %v1759
        %v1796 = vunpack.c.l.b16 %v1760
        %v1797 = vunpack.c.l.b16 %v1761
        %v1798 = vunpack.c.l.b16 %v1762
        %v1799 = vunpack.c.l.b16 %v1763
        %v1800 = vunpack.c.l.b16 %v1764
        %v1801 = vunpack.c.l.b16 %v1765
        %v1802 = vunpack.c.l.b16 %v1766
        %v1803 = vunpack.c.l.b16 %v1767
        %v1804 = vunpack.c.l.b16 %v1768
        %v1805 = vunpack.c.l.b16 %v1769
        %v1806 = vunpack.c.l.b16 %v1770
        %v1807 = vunpack.c.l.b16 %v1771
        %v1808 = vunpack.c.l.b16 %v1772
        %v1809 = vpack.c.b16 %v1794, %v1793
        %v1810 = vpack.c.b16 %v1796, %v1795
        %v1811 = vpack.c.b16 %v1798, %v1797
        %v1812 = vpack.c.b16 %v1800, %v1799
        %v1813 = vpack.c.b16 %v1802, %v1801
        %v1814 = vpack.c.b16 %v1804, %v1803
        %v1815 = vpack.c.b16 %v1806, %v1805
        %v1816 = vpack.c.b16 %v1808, %v1807
        %1825 = vmatpush.bf16.msra.mxu0 %v1816
        %1826 = vmatpush.bf16.msra.mxu0 %v1815
        %1827 = vmatpush.bf16.msra.mxu0 %v1814
        %1828 = vmatpush.bf16.msra.mxu0 %v1813
        %1829 = vmatpush.bf16.msra.mxu0 %v1812
        %1830 = vmatpush.bf16.msra.mxu0 %v1811
        %1831 = vmatpush.bf16.msra.mxu0 %v1810
        %1832 = vmatpush.bf16.msra.mxu0 %v1809
        %1833 = vmatmul.bf16.gmra.mxu0 %v1756
        %v1834 = vpop.f32.mrf.mxu0
        %v1835 = vadd.f32 %v1775, %v1834
        %v1836 = vpop.f32.mrf.mxu0
        %1837 = vdwg.mxu0
        %v1838 = vadd.f32 %v1677, %v1835
        %1839 = vst.msk [vmem:[%s464] sm:$0xff] %vm482, %v1838
        %s1840 = sand.u32 %s318, 1
        %s1841 = scalar_lea.sflag [#allocation3], %s1840
        %s1842 = sand.u32 %s318, 1
        %s1843 = smul.addr %s1842, 8
        %s1844 = scalar_lea.vmem [#allocation2], %s1843
        %s1845 = sand.u32 %s344, 1
        %s1846 = scalar_lea.sflag [#allocation5], %s1845
        %s1847 = sand.u32 %s344, 1
        %s1848 = smul.addr %s1847, 16
        %s1849 = scalar_lea.vmem [#allocation4], %s1848
        // Predicated region
        $region73: #{tpu_custom_call.1} parent=71 // pred_check
          %p1850 = pneg %p328
        $region74: #{tpu_custom_call.1} parent=71 // pred_check_branch
          %1852 = sbr.rel (%p1850) target = $region76
        $region75: #{tpu_custom_call.1} parent=71 // pred_region
          %1854 = vsyncadd %s1841, 0
          %s1855 = smul.addr %s32, 8
          %s1856 = scalar_lea.hbm %s13, %s1855
          %s1858 = sshll.u32 %s1844, 4
          %s1859 = int_to_ptr.vmem [resolvable:$true] %s1858
          %s1860 = sshll.u32 %s1856, 4
          %s1861 = int_to_ptr.hbm [resolvable:$true] %s1860
          %1863 = dma.vmem_to_hbm [thread:$0]  %s1859, 128, %s1861, %s1841
        $region76: #{tpu_custom_call.1} parent=71 // pred_fallthru
          _
        // Predicated region
        $region77: #{tpu_custom_call.1} parent=71 // pred_check
          %p1864 = pneg %p354
        $region78: #{tpu_custom_call.1} parent=71 // pred_check_branch
          %1866 = sbr.rel (%p1864) target = $region80
        $region79: #{tpu_custom_call.1} parent=71 // pred_region
          %1868 = vsyncadd %s1846, 0
          %s1869 = smul.addr %s32, 4
          %s1870 = smul.addr %s1869, 4
          %s1871 = scalar_lea.hbm %s14, %s1870
          %s1872 = sshll.u32 %s1849, 4
          %s1873 = int_to_ptr.vmem [resolvable:$true] %s1872
          %s1874 = sshll.u32 %s1871, 4
          %s1875 = int_to_ptr.hbm [resolvable:$true] %s1874
          %1880 = dma.vmem_to_hbm [thread:$0]  %s1873, 256, %s1875, %s1846, 64, 64, 4
        $region80: #{tpu_custom_call.1} parent=71 // pred_fallthru
          _
      $region72: #{tpu_custom_call.1} parent=5 // pred_fallthru
        _
      %p1881 = scmp.le.s32.totalorder 2, %s27
      // Predicated region
      $region81: #{tpu_custom_call.1} parent=5 // pred_check
        %p1882 = pneg %p1881
      $region82: #{tpu_custom_call.1} parent=5 // pred_check_branch
        %1884 = sbr.rel (%p1882) target = $region84
      $region83: #{tpu_custom_call.1} parent=5 // pred_region
        %s1885 = ssub.s32 %s27, 2
        // Predicated region
        $region85: #{tpu_custom_call.1} parent=83 // pred_check
          %p1886 = pneg %p334
        $region86: #{tpu_custom_call.1} parent=83 // pred_check_branch
          %1888 = sbr.rel (%p1886) target = $region88
        $region87: #{tpu_custom_call.1} parent=83 // pred_region
          %s1889 = sand.u32 %s319, 1
          %s1890 = scalar_lea.sflag [#allocation3], %s1889
          %s1891 = sand.u32 %s319, 1
          %s1892 = smul.addr %s1891, 8
          %s1893 = scalar_lea.vmem [#allocation2], %s1892
          %1895 = dma.done %s1890, 128
        $region88: #{tpu_custom_call.1} parent=83 // pred_fallthru
          _
        // Predicated region
        $region89: #{tpu_custom_call.1} parent=83 // pred_check
          %p1896 = pneg %p360
        $region90: #{tpu_custom_call.1} parent=83 // pred_check_branch
          %1898 = sbr.rel (%p1896) target = $region92
        $region91: #{tpu_custom_call.1} parent=83 // pred_region
          %s1899 = sand.u32 %s345, 1
          %s1900 = scalar_lea.sflag [#allocation5], %s1899
          %s1901 = sand.u32 %s345, 1
          %s1902 = smul.addr %s1901, 16
          %s1903 = scalar_lea.vmem [#allocation4], %s1902
          %1905 = dma.done %s1900, 256
        $region92: #{tpu_custom_call.1} parent=83 // pred_fallthru
          _
      $region84: #{tpu_custom_call.1} parent=5 // pred_fallthru
        _
    $region6: #{tpu_custom_call.1} parent=1 // loop_footer
      %s31 = sadd.s32 1, %s27
    $region7: #{tpu_custom_call.1} parent=1 // loop_footer_branch
      %26 = sbr.rel target = $region3
    $region8: #{tpu_custom_call.1} parent=1 // loop_exit
      _
    %1906 = vsyncpa [#allocation3], 1
    %s1907 = scalar_lea.sflag [#allocation3], 1
    %1908 = vsyncpa %s1907, 1
    %1909 = vsyncpa [#allocation5], 1
    %s1910 = scalar_lea.sflag [#allocation5], 1
    %1911 = vsyncpa %s1910, 1

</llo_original>
